<compile_context>
chip_gen: v7x
topology: tpu7x:2x2x1
jax: 0.10.0
libtpu: 0.0.40
codegen_flags: <defaults>
</compile_context>

<pallas_src>
import functools
import math

import jax
import jax.numpy as jnp
from jax.experimental import pallas as pl
from jax.experimental.pallas import tpu as pltpu


IN_FEATURES = 4096
OUT_W = 1280          # last_out_w: Linear(4096, 1280)
OUT_B = 1             # last_out_b: Linear(4096, 1)
LANE = 128


def _round_up(x, m):
    return (x + m - 1) // m * m


# --------------------------------------------------------------------------- #
# Pallas kernel: y = x @ w + bias, K reduction tiled on the grid, f32 accumulate.
# --------------------------------------------------------------------------- #
def _fused_linear_kernel(x_ref, w_ref, b_ref, o_ref, acc_ref):
    k = pl.program_id(1)

    @pl.when(k == 0)
    def _():
        acc_ref[...] = jnp.zeros_like(acc_ref)

    acc_ref[...] += jnp.dot(x_ref[...], w_ref[...],
                            preferred_element_type=jnp.float32)

    @pl.when(k == pl.num_programs(1) - 1)
    def _():
        o_ref[...] = (acc_ref[...] + b_ref[...]).astype(o_ref.dtype)


def fused_linear(x_bf16, w_bf16, bias_f32, *, tk=512):
    """(Mp, K) bf16 @ (K, Np) bf16 + (1, Np) f32 -> (Mp, Np) f32."""
    Mp, K = x_bf16.shape
    Np = w_bf16.shape[1]
    assert K % tk == 0 and Np % LANE == 0 and Mp % 8 == 0
    tm = Mp if Mp <= 256 else 256
    assert Mp % tm == 0
    grid = (Mp // tm, K // tk)

    return pl.pallas_call(
        _fused_linear_kernel,
        out_shape=jax.ShapeDtypeStruct((Mp, Np), jnp.float32),
        grid_spec=pltpu.PrefetchScalarGridSpec(
            num_scalar_prefetch=0,
            grid=grid,
            in_specs=[
                pl.BlockSpec((tm, tk), lambda i, k: (i, k)),   # activations
                pl.BlockSpec((tk, Np), lambda i, k: (k, 0)),   # fused weight tile
                pl.BlockSpec((1, Np), lambda i, k: (0, 0)),    # fused bias (constant)
            ],
            out_specs=pl.BlockSpec((tm, Np), lambda i, k: (i, 0)),
            scratch_shapes=[pltpu.VMEM((tm, Np), jnp.float32)],
        ),
        compiler_params=pltpu.CompilerParams(
            dimension_semantics=("parallel", "arbitrary"),
        ),
    )(x_bf16, w_bf16, bias_f32)


# --------------------------------------------------------------------------- #
# Parameters + forward wrapper
# --------------------------------------------------------------------------- #
def build_params(key):
    # PyTorch default nn.Linear init: U(-1/sqrt(fan_in), 1/sqrt(fan_in)) for W and b.
    kw, kbw, kb, kbb = jax.random.split(key, 4)
    bound = 1.0 / math.sqrt(IN_FEATURES)
    w_w = jax.random.uniform(kw, (OUT_W, IN_FEATURES), jnp.float32, -bound, bound)
    b_w = jax.random.uniform(kbw, (OUT_W,), jnp.float32, -bound, bound)
    w_b = jax.random.uniform(kb, (OUT_B, IN_FEATURES), jnp.float32, -bound, bound)
    b_b = jax.random.uniform(kbb, (OUT_B,), jnp.float32, -bound, bound)

    # Fuse the two Linear layers: (K,1280) | (K,1) -> (K, 1408) lane-dense padded.
    n_real = OUT_W + OUT_B
    n_pad = _round_up(n_real, LANE)
    w_cat = jnp.concatenate([w_w.T, w_b.T], axis=1)
    w_cat = jnp.pad(w_cat, ((0, 0), (0, n_pad - n_real)))
    b_cat = jnp.concatenate([b_w, b_b], axis=0)
    b_cat = jnp.pad(b_cat, (0, n_pad - n_real))

    return {
        "w_cat": w_cat.astype(jnp.bfloat16),
        "b_cat": b_cat.reshape(1, n_pad).astype(jnp.float32),
        # float32 originals kept only for the host-side reference check.
        "w_w": w_w, "b_w": b_w, "w_b": w_b, "b_b": b_b,
    }


def l1_forward(params, x):
    """x: (B, 4096) f32 -> {'res_last_out_w': (B,1280), 'res_last_out_b': (B,1)}."""
    B, K = x.shape
    assert K == IN_FEATURES
    Mp = _round_up(max(B, 8), 8)                       # sublane-align the batch
    xp = jnp.pad(x, ((0, Mp - B), (0, 0))).astype(jnp.bfloat16)
    y = fused_linear(xp, params["w_cat"], params["b_cat"])
    return {
        "res_last_out_w": y[:B, :OUT_W],
        "res_last_out_b": y[:B, OUT_W:OUT_W + OUT_B],
    }


if __name__ == "__main__":
    key = jax.random.PRNGKey(0)
    kp, kx = jax.random.split(key)
    params = build_params(kp)

    B = 8
    x = jax.random.normal(kx, (B, IN_FEATURES), jnp.float32)

    fwd = jax.jit(functools.partial(l1_forward, params))
    out = jax.block_until_ready(fwd(x))

    yw, yb = out["res_last_out_w"], out["res_last_out_b"]
    assert yw.shape == (B, OUT_W) and yb.shape == (B, OUT_B)
    assert yw.dtype == jnp.float32 and yb.dtype == jnp.float32
    assert bool(jnp.all(jnp.isfinite(yw))) and bool(jnp.all(jnp.isfinite(yb)))

    # Sanity check vs. a plain-JAX reference built from the same bf16-rounded inputs.
    xb = x.astype(jnp.bfloat16).astype(jnp.float32)
    ww = params["w_w"].astype(jnp.bfloat16).astype(jnp.float32)
    wb = params["w_b"].astype(jnp.bfloat16).astype(jnp.float32)
    ref_w = xb @ ww.T + params["b_w"]
    ref_b = xb @ wb.T + params["b_b"]
    assert float(jnp.max(jnp.abs(yw - ref_w))) < 5e-2
    assert float(jnp.max(jnp.abs(yb - ref_b))) < 5e-2

    print("KERNEL_OK")
</pallas_src>

<mosaic_0001>
module attributes {stable_mosaic.version = 11 : i64} {
  func.func @_fused_linear_kernel(%arg0: i32, %arg1: i32, %arg2: memref<8x512xbf16, #tpu.memory_space<vmem>>, %arg3: memref<512x1408xbf16, #tpu.memory_space<vmem>>, %arg4: memref<1x1408xf32, #tpu.memory_space<vmem>>, %arg5: memref<8x1408xf32, #tpu.memory_space<vmem>>, %arg6: memref<8x1408xf32, #tpu.memory_space<vmem>>) attributes {dimension_semantics = [#tpu.dimension_semantics<parallel>, #tpu.dimension_semantics<arbitrary>], iteration_bounds = array<i64: 1, 8>, scalar_prefetch = 0 : i64, scratch_operands = 1 : i64, tpu.core_type = #tpu.core_type<tc>, window_params = [{transform_indices = @transform_0, window_bounds = array<i64: 8, 512>}, {transform_indices = @transform_1, window_bounds = array<i64: 512, 1408>}, {pipeline_mode = #tpu.pipeline_mode<synchronous>, transform_indices = @transform_2, window_bounds = array<i64: 1, 1408>}, {transform_indices = @transform_3, window_bounds = array<i64: 8, 1408>}]} {
    %c0_i32 = arith.constant 0 : i32
    %0 = arith.cmpi eq, %arg1, %c0_i32 : i32
    %1 = arith.extui %0 : i1 to i32
    %c0_i32_0 = arith.constant 0 : i32
    %2 = arith.cmpi ne, %1, %c0_i32_0 : i32
    scf.if %2 {
      %cst_9 = arith.constant 0.000000e+00 : f32
      %12 = vector.broadcast %cst_9 : f32 to vector<8x1408xf32>
      %c0_10 = arith.constant 0 : index
      %c0_11 = arith.constant 0 : index
      %13 = vector.load %arg6[%c0_10, %c0_11] : memref<8x1408xf32, #tpu.memory_space<vmem>>, vector<8x1408xf32>
      tpu.vector_store %arg6[%c0_10, %c0_11], %12 {strides = array<i32>} : memref<8x1408xf32, #tpu.memory_space<vmem>>, vector<8x1408xf32>,
    } else {
    }
    %c0 = arith.constant 0 : index
    %c0_1 = arith.constant 0 : index
    %3 = vector.load %arg6[%c0, %c0_1] : memref<8x1408xf32, #tpu.memory_space<vmem>>, vector<8x1408xf32>
    %c0_2 = arith.constant 0 : index
    %c0_3 = arith.constant 0 : index
    %4 = vector.load %arg2[%c0_2, %c0_3] : memref<8x512xbf16, #tpu.memory_space<vmem>>, vector<8x512xbf16>
    %c0_4 = arith.constant 0 : index
    %c0_5 = arith.constant 0 : index
    %5 = vector.load %arg3[%c0_4, %c0_5] : memref<512x1408xbf16, #tpu.memory_space<vmem>>, vector<512x1408xbf16>
    %cst = arith.constant dense<0.000000e+00> : vector<8x1408xf32>
    %6 = tpu.matmul %4, %5, %cst {dimension_numbers = #tpu.dot_dimension_numbers<[1], [0], [0], [1], [0, 0, 1, 1], [], []>} : vector<8x512xbf16>, vector<512x1408xbf16>, vector<8x1408xf32> -> vector<8x1408xf32>
    %7 = arith.addf %3, %6 : vector<8x1408xf32>
    %c0_6 = arith.constant 0 : index
    %c0_7 = arith.constant 0 : index
    %8 = vector.load %arg6[%c0_6, %c0_7] : memref<8x1408xf32, #tpu.memory_space<vmem>>, vector<8x1408xf32>
    tpu.vector_store %arg6[%c0_6, %c0_7], %7 {strides = array<i32>} : memref<8x1408xf32, #tpu.memory_space<vmem>>, vector<8x1408xf32>,
    %c7_i32 = arith.constant 7 : i32
    %9 = arith.cmpi eq, %arg1, %c7_i32 : i32
    %10 = arith.extui %9 : i1 to i32
    %c0_i32_8 = arith.constant 0 : i32
    %11 = arith.cmpi ne, %10, %c0_i32_8 : i32
    scf.if %11 {
      %c0_9 = arith.constant 0 : index
      %c0_10 = arith.constant 0 : index
      %12 = vector.load %arg6[%c0_9, %c0_10] : memref<8x1408xf32, #tpu.memory_space<vmem>>, vector<8x1408xf32>
      %c0_11 = arith.constant 0 : index
      %c0_12 = arith.constant 0 : index
      %13 = vector.load %arg4[%c0_11, %c0_12] : memref<1x1408xf32, #tpu.memory_space<vmem>>, vector<1x1408xf32>
      %14 = vector.broadcast %13 : vector<1x1408xf32> to vector<8x1408xf32>
      %15 = arith.addf %12, %14 : vector<8x1408xf32>
      %c0_13 = arith.constant 0 : index
      %c0_14 = arith.constant 0 : index
      %16 = vector.load %arg5[%c0_13, %c0_14] : memref<8x1408xf32, #tpu.memory_space<vmem>>, vector<8x1408xf32>
      tpu.vector_store %arg5[%c0_13, %c0_14], %15 {strides = array<i32>} : memref<8x1408xf32, #tpu.memory_space<vmem>>, vector<8x1408xf32>,
    } else {
    }
    return
  }
  func.func @transform_0(%arg0: i32, %arg1: i32) -> (i32, i32) {
    %c0_i32 = arith.constant 0 : i32
    return %arg0, %arg1 : i32, i32
  }
  func.func @transform_1(%arg0: i32, %arg1: i32) -> (i32, i32) {
    %c0_i32 = arith.constant 0 : i32
    %c0_i32_0 = arith.constant 0 : i32
    return %arg1, %c0_i32 : i32, i32
  }
  func.func @transform_2(%arg0: i32, %arg1: i32) -> (i32, i32) {
    %c0_i32 = arith.constant 0 : i32
    %c0_i32_0 = arith.constant 0 : i32
    %c0_i32_1 = arith.constant 0 : i32
    return %c0_i32, %c0_i32_0 : i32, i32
  }
  func.func @transform_3(%arg0: i32, %arg1: i32) -> (i32, i32) {
    %c0_i32 = arith.constant 0 : i32
    %c0_i32_0 = arith.constant 0 : i32
    return %arg0, %c0_i32 : i32, i32
  }
}

</mosaic_0001>

<llo_original>
// kernel: l1_forward.1
$region0: #{l1_forward.1}
  #allocation0 [shape = 'u32[]', space=smem, size = 0x4, offset = 0x4, fixed_abs, tag = 'smem constant byte address 0x4 - core index']
  #allocation1 [shape = 'u32[144,128]{1,0:T(1,128)}', space=vmem, size = 0x12000, scoped, tag = 'internal scratch']
  #allocation2 [shape = 'f32[8,1408]{1,0:T(8,128)}', space=vmem, size = 0xb000, scoped, tag = 'scratch operand']
  %s0 = inlined_call_operand.vmem [shape: bf16[8,4096], index: 0, kind: input, shape index: {}]
  %s1 = inlined_call_operand.vmem [shape: bf16[4096,1408], index: 1, kind: input, shape index: {}]
  %s2 = inlined_call_operand.vmem [shape: f32[1,1408], index: 2, kind: input, shape index: {}]
  %s3 = inlined_call_operand.vmem [shape: f32[8,1408], index: 3, kind: output, shape index: {}]
  %s4 = sld [smem:[#allocation0]]
  $region53: #{l1_forward.1} parent=0
    _
  %s6 = ssub.s32 1, %s4
  %s7 = scalar_select 0, %s6, %s4
  loop: start=0, step=1, limit=10
  $region2: #{l1_forward.1} parent=0 // loop_pre_header
    _
  $region3: #{l1_forward.1} parent=0 // loop_header
    %s9 = sphi 0, %s13
    %p10 = scmp.ge.s32.totalorder %s9, 10
    %s16 = sphi 0, %s28
    %s17 = sphi 0, %s24
    %s18 = sphi 0, %s16
    %s19 = sphi 0, %s17
    %s20 = sphi 0, %s18
    %s21 = sphi 0, %s19
    %s33 = sphi 0, %s35
    %s36 = sphi 0, %s33
    %s37 = sphi 0, %s36
    %s53 = sphi 0, %s37
    %s59 = sphi 0, %s61
    %s62 = sphi 0, %s59
    %s63 = sphi 0, %s62
    %s79 = sphi 0, %s63
    %s83 = sphi 0, %s83
    %s85 = sphi 0, %s83
    %s86 = sphi 0, %s85
    %s100 = sphi 0, %s86
    %s106 = sphi 0, %s108
    %s109 = sphi 0, %s106
    %s110 = sphi 0, %s109
    %s126 = sphi 0, %s110
  $region4: #{l1_forward.1} parent=0 // loop_header_branch
    %12 = sbr.rel (%p10) target = $region8
  $region5: #{l1_forward.1} parent=0 // loop_body
    %s14 = ssub.s32 %s9, 1
    %s15 = ssub.s32 %s9, 2
    %s22 = sadd.s32 1, %s17
    %p23 = scmp.ge.s32.totalorder %s22, 8
    %s24 = scalar_select %p23, 0, %s22
    %s25 = sadd.s32 1, %s16
    %s26 = scalar_select %p23, %s25, %s16
    %p27 = scmp.ge.s32.totalorder %s26, 1
    %s28 = scalar_select %p27, 0, %s26
    %s29 = ssub.s32 %s16, %s28
    %s30 = ssub.s32 %s17, %s24
    %s31 = sor.u32 %s29, %s30
    %p32 = scmp.eq.s32.totalorder %s31, 0
    %s34 = sadd.s32 %s33, 1
    %s35 = scalar_select %p32, %s33, %s34
    %p38 = pneg %p32
    %p39 = scmp.eq.s32.totalorder %s9, 7
    %p40 = por %p38, %p39
    %p41 = scmp.ne.s32.totalorder %s33, %s36
    %p42 = scmp.eq.s32.totalorder %s9, 0
    %p43 = por %p41, %p42
    %p44 = scmp.ne.s32.totalorder %s33, %s36
    %p45 = scmp.eq.s32.totalorder %s14, 7
    %p46 = por %p44, %p45
    %p47 = scmp.ne.s32.totalorder %s36, %s37
    %p48 = scmp.eq.s32.totalorder %s14, 0
    %p49 = por %p47, %p48
    %p50 = scmp.ne.s32.totalorder %s36, %s37
    %p51 = scmp.eq.s32.totalorder %s15, 7
    %p52 = por %p50, %p51
    %p54 = scmp.ne.s32.totalorder %s37, %s53
    %p55 = scmp.eq.s32.totalorder %s15, 0
    %p56 = por %p54, %p55
    %s57 = ssub.s32 %s17, %s24
    %p58 = scmp.eq.s32.totalorder %s57, 0
    %s60 = sadd.s32 %s59, 1
    %s61 = scalar_select %p58, %s59, %s60
    %p64 = pneg %p58
    %p65 = scmp.eq.s32.totalorder %s9, 7
    %p66 = por %p64, %p65
    %p67 = scmp.ne.s32.totalorder %s59, %s62
    %p68 = scmp.eq.s32.totalorder %s9, 0
    %p69 = por %p67, %p68
    %p70 = scmp.ne.s32.totalorder %s59, %s62
    %p71 = scmp.eq.s32.totalorder %s14, 7
    %p72 = por %p70, %p71
    %p73 = scmp.ne.s32.totalorder %s62, %s63
    %p74 = scmp.eq.s32.totalorder %s14, 0
    %p75 = por %p73, %p74
    %p76 = scmp.ne.s32.totalorder %s62, %s63
    %p77 = scmp.eq.s32.totalorder %s15, 7
    %p78 = por %p76, %p77
    %p80 = scmp.ne.s32.totalorder %s63, %s79
    %p81 = scmp.eq.s32.totalorder %s15, 0
    %p82 = por %p80, %p81
    %s84 = sadd.s32 %s83, 1
    %p87 = scmp.eq.s32.totalorder %s9, 7
    %p88 = scmp.ne.s32.totalorder %s83, %s85
    %p89 = scmp.eq.s32.totalorder %s9, 0
    %p90 = por %p88, %p89
    %p91 = scmp.ne.s32.totalorder %s83, %s85
    %p92 = scmp.eq.s32.totalorder %s14, 7
    %p93 = por %p91, %p92
    %p94 = scmp.ne.s32.totalorder %s85, %s86
    %p95 = scmp.eq.s32.totalorder %s14, 0
    %p96 = por %p94, %p95
    %p97 = scmp.ne.s32.totalorder %s85, %s86
    %p98 = scmp.eq.s32.totalorder %s15, 7
    %p99 = por %p97, %p98
    %p101 = scmp.ne.s32.totalorder %s86, %s100
    %p102 = scmp.eq.s32.totalorder %s15, 0
    %p103 = por %p101, %p102
    %s104 = ssub.s32 %s16, %s28
    %p105 = scmp.eq.s32.totalorder %s104, 0
    %s107 = sadd.s32 %s106, 1
    %s108 = scalar_select %p105, %s106, %s107
    %p111 = pneg %p105
    %p112 = scmp.eq.s32.totalorder %s9, 7
    %p113 = por %p111, %p112
    %p114 = scmp.ne.s32.totalorder %s106, %s109
    %p115 = scmp.eq.s32.totalorder %s9, 0
    %p116 = por %p114, %p115
    %p117 = scmp.ne.s32.totalorder %s106, %s109
    %p118 = scmp.eq.s32.totalorder %s14, 7
    %p119 = por %p117, %p118
    %p120 = scmp.ne.s32.totalorder %s109, %s110
    %p121 = scmp.eq.s32.totalorder %s14, 0
    %p122 = por %p120, %p121
    %p123 = scmp.ne.s32.totalorder %s109, %s110
    %p124 = scmp.eq.s32.totalorder %s15, 7
    %p125 = por %p123, %p124
    %p127 = scmp.ne.s32.totalorder %s110, %s126
    %p128 = scmp.eq.s32.totalorder %s15, 0
    %p129 = por %p127, %p128
    %p130 = scmp.le.s32.totalorder 1, %s9
    %p131 = scmp.lt.s32.totalorder %s9, 9
    %p132 = pnand %p130, %p131
    %p133 = pneg %p132
    // Predicated region
    $region9: #{l1_forward.1} parent=5 // pred_check
      _
    $region10: #{l1_forward.1} parent=5 // pred_check_branch
      %135 = sbr.rel (%p132) target = $region12
    $region11: #{l1_forward.1} parent=5 // pred_region
      %s136 = ssub.s32 %s9, 1
      // Predicated region
      $region13: #{l1_forward.1} parent=11 // pred_check
        %p137 = pneg %p96
      $region14: #{l1_forward.1} parent=11 // pred_check_branch
        %139 = sbr.rel (%p137) target = $region16
      $region15: #{l1_forward.1} parent=11 // pred_region
        _
      $region16: #{l1_forward.1} parent=11 // pred_fallthru
        _
    $region12: #{l1_forward.1} parent=5 // pred_fallthru
      _
    %p140 = scmp.lt.s32.totalorder %s9, 8
    // Predicated region
    $region17: #{l1_forward.1} parent=5 // pred_check
      %p141 = pneg %p140
    $region18: #{l1_forward.1} parent=5 // pred_check_branch
      %143 = sbr.rel (%p141) target = $region20
    $region19: #{l1_forward.1} parent=5 // pred_region
      // Predicated region
      $region21: #{l1_forward.1} parent=19 // pred_check
        %p144 = pneg %p43
      $region22: #{l1_forward.1} parent=19 // pred_check_branch
        %146 = sbr.rel (%p144) target = $region24
      $region23: #{l1_forward.1} parent=19 // pred_region
        %s147 = smul.u32 4, %s17
        %p148 = scmp.lt.s32.totalorder %s16, 0
        %s149 = scalar_select %p148, %s16, 0
        %p150 = scmp.lt.s32.totalorder %s147, 31
        %s151 = scalar_select %p150, %s147, 31
        %s152 = smul.addr %s149, 32
        %s153 = sadd.s32 %s151, %s152
        %s154 = smul.addr %s153, 4
        %s155 = scalar_lea.vmem %s0, %s154
        %s156 = smul.u32 4, %s17
      $region24: #{l1_forward.1} parent=19 // pred_fallthru
        _
      // Predicated region
      $region25: #{l1_forward.1} parent=19 // pred_check
        %p157 = pneg %p69
      $region26: #{l1_forward.1} parent=19 // pred_check_branch
        %159 = sbr.rel (%p157) target = $region28
      $region27: #{l1_forward.1} parent=19 // pred_region
        %s160 = smul.u32 64, %s17
        %p161 = scmp.lt.s32.totalorder %s160, 511
        %s162 = scalar_select %p161, %s160, 511
        %s163 = smul.addr %s162, 11
        %s164 = smul.addr %s163, 4
        %s165 = scalar_lea.vmem %s1, %s164
        %s166 = smul.u32 64, %s17
      $region28: #{l1_forward.1} parent=19 // pred_fallthru
        _
    $region20: #{l1_forward.1} parent=5 // pred_fallthru
      _
    %p167 = scmp.le.s32.totalorder 1, %s9
    %p168 = scmp.lt.s32.totalorder %s9, 9
    %p169 = pnand %p167, %p168
    %p170 = pneg %p169
    // Predicated region
    $region29: #{l1_forward.1} parent=5 // pred_check
      _
    $region30: #{l1_forward.1} parent=5 // pred_check_branch
      %172 = sbr.rel (%p169) target = $region32
    $region31: #{l1_forward.1} parent=5 // pred_region
      %s173 = ssub.s32 %s9, 1
      %s174 = smul.u32 4, %s19
      %p175 = scmp.lt.s32.totalorder %s18, 0
      %s176 = scalar_select %p175, %s18, 0
      %p177 = scmp.lt.s32.totalorder %s174, 31
      %s178 = scalar_select %p177, %s174, 31
      %s179 = smul.addr %s176, 32
      %s180 = sadd.s32 %s178, %s179
      %s181 = smul.addr %s180, 4
      %s182 = scalar_lea.vmem %s0, %s181
      %p183 = pneg %p49
      %p184 = pneg %p46
      %s185 = smul.u32 64, %s19
      %p186 = scmp.lt.s32.totalorder %s185, 511
      %s187 = scalar_select %p186, %s185, 511
      %s188 = smul.addr %s187, 11
      %s189 = smul.addr %s188, 4
      %s190 = scalar_lea.vmem %s1, %s189
      %p191 = pneg %p75
      %p192 = pneg %p72
      %p193 = pneg %p96
      %p194 = pneg %p93
      %p195 = pneg %p122
      %p196 = pneg %p119
      %p197 = scmp.lt.s32.totalorder %s18, 0
      %s198 = scalar_select %p197, %s18, 0
      %s199 = smul.addr %s198, 11
      %s200 = smul.addr %s199, 8
      %s201 = scalar_lea.vmem %s3, %s200
      %s202 = smul.u32 4, %s19
      %p203 = scmp.lt.s32.totalorder %s18, 0
      %s204 = scalar_select %p203, %s18, 0
      %p205 = scmp.lt.s32.totalorder %s202, 31
      %s206 = scalar_select %p205, %s202, 31
      %s207 = smul.addr %s204, 32
      %s208 = sadd.s32 %s206, %s207
      %s209 = smul.addr %s208, 4
      %s210 = scalar_lea.vmem %s0, %s209
      %s211 = smul.u32 4, %s19
      %s212 = smul.u32 64, %s19
      %p213 = scmp.lt.s32.totalorder %s212, 511
      %s214 = scalar_select %p213, %s212, 511
      %s215 = smul.addr %s214, 11
      %s216 = smul.addr %s215, 4
      %s217 = scalar_lea.vmem %s1, %s216
      %s218 = smul.u32 64, %s19
      %p219 = scmp.lt.s32.totalorder %s18, 0
      %s220 = scalar_select %p219, %s18, 0
      %s221 = smul.addr %s220, 11
      %s222 = smul.addr %s221, 8
      %s223 = scalar_lea.vmem %s3, %s222
      %p225 = scmp.eq.s32.totalorder %s19, 0
      // Predicated region
      $region33: #{l1_forward.1} parent=31 // pred_check
        %p226 = pneg %p225
      $region34: #{l1_forward.1} parent=31 // pred_check_branch
        %228 = sbr.rel (%p226) target = $region36
      $region35: #{l1_forward.1} parent=31 // pred_region
        %229 = vst [vmem:[#allocation2] sm:$0xff] 0.0
        %230 = vst [vmem:[#allocation2 + $0x8] sm:$0xff] 0.0
        %231 = vst [vmem:[#allocation2 + $0x10] sm:$0xff] 0.0
        %232 = vst [vmem:[#allocation2 + $0x18] sm:$0xff] 0.0
        %233 = vst [vmem:[#allocation2 + $0x20] sm:$0xff] 0.0
        %234 = vst [vmem:[#allocation2 + $0x28] sm:$0xff] 0.0
        %235 = vst [vmem:[#allocation2 + $0x30] sm:$0xff] 0.0
        %236 = vst [vmem:[#allocation2 + $0x38] sm:$0xff] 0.0
        %237 = vst [vmem:[#allocation2 + $0x40] sm:$0xff] 0.0
        %238 = vst [vmem:[#allocation2 + $0x48] sm:$0xff] 0.0
        %239 = vst [vmem:[#allocation2 + $0x50] sm:$0xff] 0.0
      $region36: #{l1_forward.1} parent=31 // pred_fallthru
        _
      %v240 = vld [vmem:[#allocation2] sm:$0xff]
      %v241 = vld [vmem:[#allocation2 + $0x8] sm:$0xff]
      %v242 = vld [vmem:[#allocation2 + $0x10] sm:$0xff]
      %v243 = vld [vmem:[#allocation2 + $0x18] sm:$0xff]
      %v244 = vld [vmem:[#allocation2 + $0x20] sm:$0xff]
      %v245 = vld [vmem:[#allocation2 + $0x28] sm:$0xff]
      %v246 = vld [vmem:[#allocation2 + $0x30] sm:$0xff]
      %v247 = vld [vmem:[#allocation2 + $0x38] sm:$0xff]
      %v248 = vld [vmem:[#allocation2 + $0x40] sm:$0xff]
      %v249 = vld [vmem:[#allocation2 + $0x48] sm:$0xff]
      %v250 = vld [vmem:[#allocation2 + $0x50] sm:$0xff]
      %v251 = vld [vmem:[%s210] sm:$0xff]
      %v252 = vld [vmem:[%s210 + $0x8] sm:$0xff]
      %v253 = vld [vmem:[%s217] sm:$0xff]
      %v254 = vld [vmem:[%s217 + $0x8] sm:$0xff]
      %v255 = vld [vmem:[%s217 + $0x10] sm:$0xff]
      %v256 = vld [vmem:[%s217 + $0x18] sm:$0xff]
      %v257 = vld [vmem:[%s217 + $0x20] sm:$0xff]
      %v258 = vld [vmem:[%s217 + $0x28] sm:$0xf]
      %v259 = vld [vmem:[%s217 + $0x2c] sm:$0xff]
      %v260 = vld [vmem:[%s217 + $0x34] sm:$0xff]
      %v261 = vld [vmem:[%s217 + $0x3c] sm:$0xff]
      %v262 = vld [vmem:[%s217 + $0x44] sm:$0xff]
      %v263 = vld [vmem:[%s217 + $0x4c] sm:$0xff]
      %v264 = vld [vmem:[%s217 + $0x54] sm:$0xf]
      %v265 = vld [vmem:[%s217 + $0x58] sm:$0xff]
      %v266 = vld [vmem:[%s217 + $0x60] sm:$0xff]
      %v267 = vld [vmem:[%s217 + $0x68] sm:$0xff]
      %v268 = vld [vmem:[%s217 + $0x70] sm:$0xff]
      %v269 = vld [vmem:[%s217 + $0x78] sm:$0xff]
      %v270 = vld [vmem:[%s217 + $0x80] sm:$0xf]
      %v271 = vld [vmem:[%s217 + $0x84] sm:$0xff]
      %v272 = vld [vmem:[%s217 + $0x8c] sm:$0xff]
      %v273 = vld [vmem:[%s217 + $0x94] sm:$0xff]
      %v274 = vld [vmem:[%s217 + $0x9c] sm:$0xff]
      %v275 = vld [vmem:[%s217 + $0xa4] sm:$0xff]
      %v276 = vld [vmem:[%s217 + $0xac] sm:$0xf]
      %v277 = vld [vmem:[%s217 + $0xb0] sm:$0xff]
      %v278 = vld [vmem:[%s217 + $0xb8] sm:$0xff]
      %v279 = vld [vmem:[%s217 + $0xc0] sm:$0xff]
      %v280 = vld [vmem:[%s217 + $0xc8] sm:$0xff]
      %v281 = vld [vmem:[%s217 + $0xd0] sm:$0xff]
      %v282 = vld [vmem:[%s217 + $0xd8] sm:$0xf]
      %v283 = vld [vmem:[%s217 + $0xdc] sm:$0xff]
      %v284 = vld [vmem:[%s217 + $0xe4] sm:$0xff]
      %v285 = vld [vmem:[%s217 + $0xec] sm:$0xff]
      %v286 = vld [vmem:[%s217 + $0xf4] sm:$0xff]
      %v287 = vld [vmem:[%s217 + $0xfc] sm:$0xff]
      %v288 = vld [vmem:[%s217 + $0x104] sm:$0xf]
      %v289 = vld [vmem:[%s217 + $0x108] sm:$0xff]
      %v290 = vld [vmem:[%s217 + $0x110] sm:$0xff]
      %v291 = vld [vmem:[%s217 + $0x118] sm:$0xff]
      %v292 = vld [vmem:[%s217 + $0x120] sm:$0xff]
      %v293 = vld [vmem:[%s217 + $0x128] sm:$0xff]
      %v294 = vld [vmem:[%s217 + $0x130] sm:$0xf]
      %v295 = vld [vmem:[%s217 + $0x134] sm:$0xff]
      %v296 = vld [vmem:[%s217 + $0x13c] sm:$0xff]
      %v297 = vld [vmem:[%s217 + $0x144] sm:$0xff]
      %v298 = vld [vmem:[%s217 + $0x14c] sm:$0xff]
      %v299 = vld [vmem:[%s217 + $0x154] sm:$0xff]
      %v300 = vld [vmem:[%s217 + $0x15c] sm:$0xf]
      %v301 = vld [vmem:[%s217 + $0x160] sm:$0xff]
      %v302 = vld [vmem:[%s217 + $0x168] sm:$0xff]
      %v303 = vld [vmem:[%s217 + $0x170] sm:$0xff]
      %v304 = vld [vmem:[%s217 + $0x178] sm:$0xff]
      %v305 = vld [vmem:[%s217 + $0x180] sm:$0xff]
      %v306 = vld [vmem:[%s217 + $0x188] sm:$0xf]
      %v307 = vld [vmem:[%s217 + $0x18c] sm:$0xff]
      %v308 = vld [vmem:[%s217 + $0x194] sm:$0xff]
      %v309 = vld [vmem:[%s217 + $0x19c] sm:$0xff]
      %v310 = vld [vmem:[%s217 + $0x1a4] sm:$0xff]
      %v311 = vld [vmem:[%s217 + $0x1ac] sm:$0xff]
      %v312 = vld [vmem:[%s217 + $0x1b4] sm:$0xf]
      %v313 = vld [vmem:[%s217 + $0x1b8] sm:$0xff]
      %v314 = vld [vmem:[%s217 + $0x1c0] sm:$0xff]
      %v315 = vld [vmem:[%s217 + $0x1c8] sm:$0xff]
      %v316 = vld [vmem:[%s217 + $0x1d0] sm:$0xff]
      %v317 = vld [vmem:[%s217 + $0x1d8] sm:$0xff]
      %v318 = vld [vmem:[%s217 + $0x1e0] sm:$0xf]
      %v319 = vld [vmem:[%s217 + $0x1e4] sm:$0xff]
      %v320 = vld [vmem:[%s217 + $0x1ec] sm:$0xff]
      %v321 = vld [vmem:[%s217 + $0x1f4] sm:$0xff]
      %v322 = vld [vmem:[%s217 + $0x1fc] sm:$0xff]
      %v323 = vld [vmem:[%s217 + $0x204] sm:$0xff]
      %v324 = vld [vmem:[%s217 + $0x20c] sm:$0xf]
      %v325 = vld [vmem:[%s217 + $0x210] sm:$0xff]
      %v326 = vld [vmem:[%s217 + $0x218] sm:$0xff]
      %v327 = vld [vmem:[%s217 + $0x220] sm:$0xff]
      %v328 = vld [vmem:[%s217 + $0x228] sm:$0xff]
      %v329 = vld [vmem:[%s217 + $0x230] sm:$0xff]
      %v330 = vld [vmem:[%s217 + $0x238] sm:$0xf]
      %v331 = vld [vmem:[%s217 + $0x23c] sm:$0xff]
      %v332 = vld [vmem:[%s217 + $0x244] sm:$0xff]
      %v333 = vld [vmem:[%s217 + $0x24c] sm:$0xff]
      %v334 = vld [vmem:[%s217 + $0x254] sm:$0xff]
      %v335 = vld [vmem:[%s217 + $0x25c] sm:$0xff]
      %v336 = vld [vmem:[%s217 + $0x264] sm:$0xf]
      %v337 = vld [vmem:[%s217 + $0x268] sm:$0xff]
      %v338 = vld [vmem:[%s217 + $0x270] sm:$0xff]
      %v339 = vld [vmem:[%s217 + $0x278] sm:$0xff]
      %v340 = vld [vmem:[%s217 + $0x280] sm:$0xff]
      %v341 = vld [vmem:[%s217 + $0x288] sm:$0xff]
      %v342 = vld [vmem:[%s217 + $0x290] sm:$0xf]
      %v343 = vld [vmem:[%s217 + $0x294] sm:$0xff]
      %v344 = vld [vmem:[%s217 + $0x29c] sm:$0xff]
      %v345 = vld [vmem:[%s217 + $0x2a4] sm:$0xff]
      %v346 = vld [vmem:[%s217 + $0x2ac] sm:$0xff]
      %v347 = vld [vmem:[%s217 + $0x2b4] sm:$0xff]
      %v348 = vld [vmem:[%s217 + $0x2bc] sm:$0xf]
      %v349 = vld [vmem:[%s217 + $0x2c0] sm:$0xff]
      %v350 = vld [vmem:[%s217 + $0x2c8] sm:$0xff]
      %v351 = vld [vmem:[%s217 + $0x2d0] sm:$0xff]
      %v352 = vld [vmem:[%s217 + $0x2d8] sm:$0xff]
      %v353 = vld [vmem:[%s217 + $0x2e0] sm:$0xff]
      %v354 = vld [vmem:[%s217 + $0x2e8] sm:$0xf]
      %v355 = vld [vmem:[%s217 + $0x2ec] sm:$0xff]
      %v356 = vld [vmem:[%s217 + $0x2f4] sm:$0xff]
      %v357 = vld [vmem:[%s217 + $0x2fc] sm:$0xff]
      %v358 = vld [vmem:[%s217 + $0x304] sm:$0xff]
      %v359 = vld [vmem:[%s217 + $0x30c] sm:$0xff]
      %v360 = vld [vmem:[%s217 + $0x314] sm:$0xf]
      %v361 = vld [vmem:[%s217 + $0x318] sm:$0xff]
      %v362 = vld [vmem:[%s217 + $0x320] sm:$0xff]
      %v363 = vld [vmem:[%s217 + $0x328] sm:$0xff]
      %v364 = vld [vmem:[%s217 + $0x330] sm:$0xff]
      %v365 = vld [vmem:[%s217 + $0x338] sm:$0xff]
      %v366 = vld [vmem:[%s217 + $0x340] sm:$0xf]
      %v367 = vld [vmem:[%s217 + $0x344] sm:$0xff]
      %v368 = vld [vmem:[%s217 + $0x34c] sm:$0xff]
      %v369 = vld [vmem:[%s217 + $0x354] sm:$0xff]
      %v370 = vld [vmem:[%s217 + $0x35c] sm:$0xff]
      %v371 = vld [vmem:[%s217 + $0x364] sm:$0xff]
      %v372 = vld [vmem:[%s217 + $0x36c] sm:$0xf]
      %v373 = vld [vmem:[%s217 + $0x370] sm:$0xff]
      %v374 = vld [vmem:[%s217 + $0x378] sm:$0xff]
      %v375 = vld [vmem:[%s217 + $0x380] sm:$0xff]
      %v376 = vld [vmem:[%s217 + $0x388] sm:$0xff]
      %v377 = vld [vmem:[%s217 + $0x390] sm:$0xff]
      %v378 = vld [vmem:[%s217 + $0x398] sm:$0xf]
      %v379 = vld [vmem:[%s217 + $0x39c] sm:$0xff]
      %v380 = vld [vmem:[%s217 + $0x3a4] sm:$0xff]
      %v381 = vld [vmem:[%s217 + $0x3ac] sm:$0xff]
      %v382 = vld [vmem:[%s217 + $0x3b4] sm:$0xff]
      %v383 = vld [vmem:[%s217 + $0x3bc] sm:$0xff]
      %v384 = vld [vmem:[%s217 + $0x3c4] sm:$0xf]
      %v385 = vld [vmem:[%s217 + $0x3c8] sm:$0xff]
      %v386 = vld [vmem:[%s217 + $0x3d0] sm:$0xff]
      %v387 = vld [vmem:[%s217 + $0x3d8] sm:$0xff]
      %v388 = vld [vmem:[%s217 + $0x3e0] sm:$0xff]
      %v389 = vld [vmem:[%s217 + $0x3e8] sm:$0xff]
      %v390 = vld [vmem:[%s217 + $0x3f0] sm:$0xf]
      %v391 = vld [vmem:[%s217 + $0x3f4] sm:$0xff]
      %v392 = vld [vmem:[%s217 + $0x3fc] sm:$0xff]
      %v393 = vld [vmem:[%s217 + $0x404] sm:$0xff]
      %v394 = vld [vmem:[%s217 + $0x40c] sm:$0xff]
      %v395 = vld [vmem:[%s217 + $0x414] sm:$0xff]
      %v396 = vld [vmem:[%s217 + $0x41c] sm:$0xf]
      %v397 = vld [vmem:[%s217 + $0x420] sm:$0xff]
      %v398 = vld [vmem:[%s217 + $0x428] sm:$0xff]
      %v399 = vld [vmem:[%s217 + $0x430] sm:$0xff]
      %v400 = vld [vmem:[%s217 + $0x438] sm:$0xff]
      %v401 = vld [vmem:[%s217 + $0x440] sm:$0xff]
      %v402 = vld [vmem:[%s217 + $0x448] sm:$0xf]
      %v403 = vld [vmem:[%s217 + $0x44c] sm:$0xff]
      %v404 = vld [vmem:[%s217 + $0x454] sm:$0xff]
      %v405 = vld [vmem:[%s217 + $0x45c] sm:$0xff]
      %v406 = vld [vmem:[%s217 + $0x464] sm:$0xff]
      %v407 = vld [vmem:[%s217 + $0x46c] sm:$0xff]
      %v408 = vld [vmem:[%s217 + $0x474] sm:$0xf]
      %v409 = vld [vmem:[%s217 + $0x478] sm:$0xff]
      %v410 = vld [vmem:[%s217 + $0x480] sm:$0xff]
      %v411 = vld [vmem:[%s217 + $0x488] sm:$0xff]
      %v412 = vld [vmem:[%s217 + $0x490] sm:$0xff]
      %v413 = vld [vmem:[%s217 + $0x498] sm:$0xff]
      %v414 = vld [vmem:[%s217 + $0x4a0] sm:$0xf]
      %v415 = vld [vmem:[%s217 + $0x4a4] sm:$0xff]
      %v416 = vld [vmem:[%s217 + $0x4ac] sm:$0xff]
      %v417 = vld [vmem:[%s217 + $0x4b4] sm:$0xff]
      %v418 = vld [vmem:[%s217 + $0x4bc] sm:$0xff]
      %v419 = vld [vmem:[%s217 + $0x4c4] sm:$0xff]
      %v420 = vld [vmem:[%s217 + $0x4cc] sm:$0xf]
      %v421 = vld [vmem:[%s217 + $0x4d0] sm:$0xff]
      %v422 = vld [vmem:[%s217 + $0x4d8] sm:$0xff]
      %v423 = vld [vmem:[%s217 + $0x4e0] sm:$0xff]
      %v424 = vld [vmem:[%s217 + $0x4e8] sm:$0xff]
      %v425 = vld [vmem:[%s217 + $0x4f0] sm:$0xff]
      %v426 = vld [vmem:[%s217 + $0x4f8] sm:$0xf]
      %v427 = vld [vmem:[%s217 + $0x4fc] sm:$0xff]
      %v428 = vld [vmem:[%s217 + $0x504] sm:$0xff]
      %v429 = vld [vmem:[%s217 + $0x50c] sm:$0xff]
      %v430 = vld [vmem:[%s217 + $0x514] sm:$0xff]
      %v431 = vld [vmem:[%s217 + $0x51c] sm:$0xff]
      %v432 = vld [vmem:[%s217 + $0x524] sm:$0xf]
      %v433 = vld [vmem:[%s217 + $0x528] sm:$0xff]
      %v434 = vld [vmem:[%s217 + $0x530] sm:$0xff]
      %v435 = vld [vmem:[%s217 + $0x538] sm:$0xff]
      %v436 = vld [vmem:[%s217 + $0x540] sm:$0xff]
      %v437 = vld [vmem:[%s217 + $0x548] sm:$0xff]
      %v438 = vld [vmem:[%s217 + $0x550] sm:$0xf]
      %v439 = vld [vmem:[%s217 + $0x554] sm:$0xff]
      %v440 = vld [vmem:[%s217 + $0x55c] sm:$0xff]
      %v441 = vld [vmem:[%s217 + $0x564] sm:$0xff]
      %v442 = vld [vmem:[%s217 + $0x56c] sm:$0xff]
      %v443 = vld [vmem:[%s217 + $0x574] sm:$0xff]
      %v444 = vld [vmem:[%s217 + $0x57c] sm:$0xf]
      %v445 = vld [vmem:[%s217 + $0x580] sm:$0xff]
      %v446 = vld [vmem:[%s217 + $0x588] sm:$0xff]
      %v447 = vld [vmem:[%s217 + $0x590] sm:$0xff]
      %v448 = vld [vmem:[%s217 + $0x598] sm:$0xff]
      %v449 = vld [vmem:[%s217 + $0x5a0] sm:$0xff]
      %v450 = vld [vmem:[%s217 + $0x5a8] sm:$0xf]
      %v451 = vld [vmem:[%s217 + $0x5ac] sm:$0xff]
      %v452 = vld [vmem:[%s217 + $0x5b4] sm:$0xff]
      %v453 = vld [vmem:[%s217 + $0x5bc] sm:$0xff]
      %v454 = vld [vmem:[%s217 + $0x5c4] sm:$0xff]
      %v455 = vld [vmem:[%s217 + $0x5cc] sm:$0xff]
      %v456 = vld [vmem:[%s217 + $0x5d4] sm:$0xf]
      %v457 = vld [vmem:[%s217 + $0x5d8] sm:$0xff]
      %v458 = vld [vmem:[%s217 + $0x5e0] sm:$0xff]
      %v459 = vld [vmem:[%s217 + $0x5e8] sm:$0xff]
      %v460 = vld [vmem:[%s217 + $0x5f0] sm:$0xff]
      %v461 = vld [vmem:[%s217 + $0x5f8] sm:$0xff]
      %v462 = vld [vmem:[%s217 + $0x600] sm:$0xf]
      %v463 = vld [vmem:[%s217 + $0x604] sm:$0xff]
      %v464 = vld [vmem:[%s217 + $0x60c] sm:$0xff]
      %v465 = vld [vmem:[%s217 + $0x614] sm:$0xff]
      %v466 = vld [vmem:[%s217 + $0x61c] sm:$0xff]
      %v467 = vld [vmem:[%s217 + $0x624] sm:$0xff]
      %v468 = vld [vmem:[%s217 + $0x62c] sm:$0xf]
      %v469 = vld [vmem:[%s217 + $0x630] sm:$0xff]
      %v470 = vld [vmem:[%s217 + $0x638] sm:$0xff]
      %v471 = vld [vmem:[%s217 + $0x640] sm:$0xff]
      %v472 = vld [vmem:[%s217 + $0x648] sm:$0xff]
      %v473 = vld [vmem:[%s217 + $0x650] sm:$0xff]
      %v474 = vld [vmem:[%s217 + $0x658] sm:$0xf]
      %v475 = vld [vmem:[%s217 + $0x65c] sm:$0xff]
      %v476 = vld [vmem:[%s217 + $0x664] sm:$0xff]
      %v477 = vld [vmem:[%s217 + $0x66c] sm:$0xff]
      %v478 = vld [vmem:[%s217 + $0x674] sm:$0xff]
      %v479 = vld [vmem:[%s217 + $0x67c] sm:$0xff]
      %v480 = vld [vmem:[%s217 + $0x684] sm:$0xf]
      %v481 = vld [vmem:[%s217 + $0x688] sm:$0xff]
      %v482 = vld [vmem:[%s217 + $0x690] sm:$0xff]
      %v483 = vld [vmem:[%s217 + $0x698] sm:$0xff]
      %v484 = vld [vmem:[%s217 + $0x6a0] sm:$0xff]
      %v485 = vld [vmem:[%s217 + $0x6a8] sm:$0xff]
      %v486 = vld [vmem:[%s217 + $0x6b0] sm:$0xf]
      %v487 = vld [vmem:[%s217 + $0x6b4] sm:$0xff]
      %v488 = vld [vmem:[%s217 + $0x6bc] sm:$0xff]
      %v489 = vld [vmem:[%s217 + $0x6c4] sm:$0xff]
      %v490 = vld [vmem:[%s217 + $0x6cc] sm:$0xff]
      %v491 = vld [vmem:[%s217 + $0x6d4] sm:$0xff]
      %v492 = vld [vmem:[%s217 + $0x6dc] sm:$0xf]
      %v493 = vld [vmem:[%s217 + $0x6e0] sm:$0xff]
      %v494 = vld [vmem:[%s217 + $0x6e8] sm:$0xff]
      %v495 = vld [vmem:[%s217 + $0x6f0] sm:$0xff]
      %v496 = vld [vmem:[%s217 + $0x6f8] sm:$0xff]
      %v497 = vld [vmem:[%s217 + $0x700] sm:$0xff]
      %v498 = vld [vmem:[%s217 + $0x708] sm:$0xf]
      %v499 = vld [vmem:[%s217 + $0x70c] sm:$0xff]
      %v500 = vld [vmem:[%s217 + $0x714] sm:$0xff]
      %v501 = vld [vmem:[%s217 + $0x71c] sm:$0xff]
      %v502 = vld [vmem:[%s217 + $0x724] sm:$0xff]
      %v503 = vld [vmem:[%s217 + $0x72c] sm:$0xff]
      %v504 = vld [vmem:[%s217 + $0x734] sm:$0xf]
      %v505 = vld [vmem:[%s217 + $0x738] sm:$0xff]
      %v506 = vld [vmem:[%s217 + $0x740] sm:$0xff]
      %v507 = vld [vmem:[%s217 + $0x748] sm:$0xff]
      %v508 = vld [vmem:[%s217 + $0x750] sm:$0xff]
      %v509 = vld [vmem:[%s217 + $0x758] sm:$0xff]
      %v510 = vld [vmem:[%s217 + $0x760] sm:$0xf]
      %v511 = vld [vmem:[%s217 + $0x764] sm:$0xff]
      %v512 = vld [vmem:[%s217 + $0x76c] sm:$0xff]
      %v513 = vld [vmem:[%s217 + $0x774] sm:$0xff]
      %v514 = vld [vmem:[%s217 + $0x77c] sm:$0xff]
      %v515 = vld [vmem:[%s217 + $0x784] sm:$0xff]
      %v516 = vld [vmem:[%s217 + $0x78c] sm:$0xf]
      %v517 = vld [vmem:[%s217 + $0x790] sm:$0xff]
      %v518 = vld [vmem:[%s217 + $0x798] sm:$0xff]
      %v519 = vld [vmem:[%s217 + $0x7a0] sm:$0xff]
      %v520 = vld [vmem:[%s217 + $0x7a8] sm:$0xff]
      %v521 = vld [vmem:[%s217 + $0x7b0] sm:$0xff]
      %v522 = vld [vmem:[%s217 + $0x7b8] sm:$0xf]
      %v523 = vld [vmem:[%s217 + $0x7bc] sm:$0xff]
      %v524 = vld [vmem:[%s217 + $0x7c4] sm:$0xff]
      %v525 = vld [vmem:[%s217 + $0x7cc] sm:$0xff]
      %v526 = vld [vmem:[%s217 + $0x7d4] sm:$0xff]
      %v527 = vld [vmem:[%s217 + $0x7dc] sm:$0xff]
      %v528 = vld [vmem:[%s217 + $0x7e4] sm:$0xf]
      %v529 = vld [vmem:[%s217 + $0x7e8] sm:$0xff]
      %v530 = vld [vmem:[%s217 + $0x7f0] sm:$0xff]
      %v531 = vld [vmem:[%s217 + $0x7f8] sm:$0xff]
      %v532 = vld [vmem:[%s217 + $0x800] sm:$0xff]
      %v533 = vld [vmem:[%s217 + $0x808] sm:$0xff]
      %v534 = vld [vmem:[%s217 + $0x810] sm:$0xf]
      %v535 = vld [vmem:[%s217 + $0x814] sm:$0xff]
      %v536 = vld [vmem:[%s217 + $0x81c] sm:$0xff]
      %v537 = vld [vmem:[%s217 + $0x824] sm:$0xff]
      %v538 = vld [vmem:[%s217 + $0x82c] sm:$0xff]
      %v539 = vld [vmem:[%s217 + $0x834] sm:$0xff]
      %v540 = vld [vmem:[%s217 + $0x83c] sm:$0xf]
      %v541 = vld [vmem:[%s217 + $0x840] sm:$0xff]
      %v542 = vld [vmem:[%s217 + $0x848] sm:$0xff]
      %v543 = vld [vmem:[%s217 + $0x850] sm:$0xff]
      %v544 = vld [vmem:[%s217 + $0x858] sm:$0xff]
      %v545 = vld [vmem:[%s217 + $0x860] sm:$0xff]
      %v546 = vld [vmem:[%s217 + $0x868] sm:$0xf]
      %v547 = vld [vmem:[%s217 + $0x86c] sm:$0xff]
      %v548 = vld [vmem:[%s217 + $0x874] sm:$0xff]
      %v549 = vld [vmem:[%s217 + $0x87c] sm:$0xff]
      %v550 = vld [vmem:[%s217 + $0x884] sm:$0xff]
      %v551 = vld [vmem:[%s217 + $0x88c] sm:$0xff]
      %v552 = vld [vmem:[%s217 + $0x894] sm:$0xf]
      %v553 = vld [vmem:[%s217 + $0x898] sm:$0xff]
      %v554 = vld [vmem:[%s217 + $0x8a0] sm:$0xff]
      %v555 = vld [vmem:[%s217 + $0x8a8] sm:$0xff]
      %v556 = vld [vmem:[%s217 + $0x8b0] sm:$0xff]
      %v557 = vld [vmem:[%s217 + $0x8b8] sm:$0xff]
      %v558 = vld [vmem:[%s217 + $0x8c0] sm:$0xf]
      %v559 = vld [vmem:[%s217 + $0x8c4] sm:$0xff]
      %v560 = vld [vmem:[%s217 + $0x8cc] sm:$0xff]
      %v561 = vld [vmem:[%s217 + $0x8d4] sm:$0xff]
      %v562 = vld [vmem:[%s217 + $0x8dc] sm:$0xff]
      %v563 = vld [vmem:[%s217 + $0x8e4] sm:$0xff]
      %v564 = vld [vmem:[%s217 + $0x8ec] sm:$0xf]
      %v565 = vld [vmem:[%s217 + $0x8f0] sm:$0xff]
      %v566 = vld [vmem:[%s217 + $0x8f8] sm:$0xff]
      %v567 = vld [vmem:[%s217 + $0x900] sm:$0xff]
      %v568 = vld [vmem:[%s217 + $0x908] sm:$0xff]
      %v569 = vld [vmem:[%s217 + $0x910] sm:$0xff]
      %v570 = vld [vmem:[%s217 + $0x918] sm:$0xf]
      %v571 = vld [vmem:[%s217 + $0x91c] sm:$0xff]
      %v572 = vld [vmem:[%s217 + $0x924] sm:$0xff]
      %v573 = vld [vmem:[%s217 + $0x92c] sm:$0xff]
      %v574 = vld [vmem:[%s217 + $0x934] sm:$0xff]
      %v575 = vld [vmem:[%s217 + $0x93c] sm:$0xff]
      %v576 = vld [vmem:[%s217 + $0x944] sm:$0xf]
      %v577 = vld [vmem:[%s217 + $0x948] sm:$0xff]
      %v578 = vld [vmem:[%s217 + $0x950] sm:$0xff]
      %v579 = vld [vmem:[%s217 + $0x958] sm:$0xff]
      %v580 = vld [vmem:[%s217 + $0x960] sm:$0xff]
      %v581 = vld [vmem:[%s217 + $0x968] sm:$0xff]
      %v582 = vld [vmem:[%s217 + $0x970] sm:$0xf]
      %v583 = vld [vmem:[%s217 + $0x974] sm:$0xff]
      %v584 = vld [vmem:[%s217 + $0x97c] sm:$0xff]
      %v585 = vld [vmem:[%s217 + $0x984] sm:$0xff]
      %v586 = vld [vmem:[%s217 + $0x98c] sm:$0xff]
      %v587 = vld [vmem:[%s217 + $0x994] sm:$0xff]
      %v588 = vld [vmem:[%s217 + $0x99c] sm:$0xf]
      %v589 = vld [vmem:[%s217 + $0x9a0] sm:$0xff]
      %v590 = vld [vmem:[%s217 + $0x9a8] sm:$0xff]
      %v591 = vld [vmem:[%s217 + $0x9b0] sm:$0xff]
      %v592 = vld [vmem:[%s217 + $0x9b8] sm:$0xff]
      %v593 = vld [vmem:[%s217 + $0x9c0] sm:$0xff]
      %v594 = vld [vmem:[%s217 + $0x9c8] sm:$0xf]
      %v595 = vld [vmem:[%s217 + $0x9cc] sm:$0xff]
      %v596 = vld [vmem:[%s217 + $0x9d4] sm:$0xff]
      %v597 = vld [vmem:[%s217 + $0x9dc] sm:$0xff]
      %v598 = vld [vmem:[%s217 + $0x9e4] sm:$0xff]
      %v599 = vld [vmem:[%s217 + $0x9ec] sm:$0xff]
      %v600 = vld [vmem:[%s217 + $0x9f4] sm:$0xf]
      %v601 = vld [vmem:[%s217 + $0x9f8] sm:$0xff]
      %v602 = vld [vmem:[%s217 + $0xa00] sm:$0xff]
      %v603 = vld [vmem:[%s217 + $0xa08] sm:$0xff]
      %v604 = vld [vmem:[%s217 + $0xa10] sm:$0xff]
      %v605 = vld [vmem:[%s217 + $0xa18] sm:$0xff]
      %v606 = vld [vmem:[%s217 + $0xa20] sm:$0xf]
      %v607 = vld [vmem:[%s217 + $0xa24] sm:$0xff]
      %v608 = vld [vmem:[%s217 + $0xa2c] sm:$0xff]
      %v609 = vld [vmem:[%s217 + $0xa34] sm:$0xff]
      %v610 = vld [vmem:[%s217 + $0xa3c] sm:$0xff]
      %v611 = vld [vmem:[%s217 + $0xa44] sm:$0xff]
      %v612 = vld [vmem:[%s217 + $0xa4c] sm:$0xf]
      %v613 = vld [vmem:[%s217 + $0xa50] sm:$0xff]
      %v614 = vld [vmem:[%s217 + $0xa58] sm:$0xff]
      %v615 = vld [vmem:[%s217 + $0xa60] sm:$0xff]
      %v616 = vld [vmem:[%s217 + $0xa68] sm:$0xff]
      %v617 = vld [vmem:[%s217 + $0xa70] sm:$0xff]
      %v618 = vld [vmem:[%s217 + $0xa78] sm:$0xf]
      %v619 = vld [vmem:[%s217 + $0xa7c] sm:$0xff]
      %v620 = vld [vmem:[%s217 + $0xa84] sm:$0xff]
      %v621 = vld [vmem:[%s217 + $0xa8c] sm:$0xff]
      %v622 = vld [vmem:[%s217 + $0xa94] sm:$0xff]
      %v623 = vld [vmem:[%s217 + $0xa9c] sm:$0xff]
      %v624 = vld [vmem:[%s217 + $0xaa4] sm:$0xf]
      %v625 = vld [vmem:[%s217 + $0xaa8] sm:$0xff]
      %v626 = vld [vmem:[%s217 + $0xab0] sm:$0xff]
      %v627 = vld [vmem:[%s217 + $0xab8] sm:$0xff]
      %v628 = vld [vmem:[%s217 + $0xac0] sm:$0xff]
      %v629 = vld [vmem:[%s217 + $0xac8] sm:$0xff]
      %v630 = vld [vmem:[%s217 + $0xad0] sm:$0xf]
      %v631 = vld [vmem:[%s217 + $0xad4] sm:$0xff]
      %v632 = vld [vmem:[%s217 + $0xadc] sm:$0xff]
      %v633 = vld [vmem:[%s217 + $0xae4] sm:$0xff]
      %v634 = vld [vmem:[%s217 + $0xaec] sm:$0xff]
      %v635 = vld [vmem:[%s217 + $0xaf4] sm:$0xff]
      %v636 = vld [vmem:[%s217 + $0xafc] sm:$0xf]
      %v639 = vunpack.c.l.b16 %v251
      %v640 = vunpack.c.h.b16 %v251
      %v641 = vunpack.c.l.b16 %v252
      %v642 = vunpack.c.h.b16 %v252
      %v643 = vpack.c.b16 %v639, %v639
      %v644 = vpack.c.b16 %v640, %v640
      %v645 = vpack.c.b16 %v641, %v641
      %v646 = vpack.c.b16 %v642, %v642
      %v1035 = vunpack.c.l.b16 %v253
      %v1036 = vunpack.c.h.b16 %v253
      %v1037 = vunpack.c.l.b16 %v254
      %v1038 = vunpack.c.h.b16 %v254
      %v1039 = vunpack.c.l.b16 %v255
      %v1040 = vunpack.c.h.b16 %v255
      %v1041 = vunpack.c.l.b16 %v256
      %v1042 = vunpack.c.h.b16 %v256
      %v1043 = vunpack.c.l.b16 %v257
      %v1044 = vunpack.c.h.b16 %v257
      %v1045 = vunpack.c.l.b16 %v258
      %v1046 = vunpack.c.l.b16 %v259
      %v1047 = vunpack.c.h.b16 %v259
      %v1048 = vunpack.c.l.b16 %v260
      %v1049 = vunpack.c.h.b16 %v260
      %v1050 = vunpack.c.l.b16 %v261
      %v1051 = vunpack.c.h.b16 %v261
      %v1052 = vunpack.c.l.b16 %v262
      %v1053 = vunpack.c.h.b16 %v262
      %v1054 = vunpack.c.l.b16 %v263
      %v1055 = vunpack.c.h.b16 %v263
      %v1056 = vunpack.c.l.b16 %v264
      %v1057 = vunpack.c.l.b16 %v265
      %v1058 = vunpack.c.h.b16 %v265
      %v1059 = vunpack.c.l.b16 %v266
      %v1060 = vunpack.c.h.b16 %v266
      %v1061 = vunpack.c.l.b16 %v267
      %v1062 = vunpack.c.h.b16 %v267
      %v1063 = vunpack.c.l.b16 %v268
      %v1064 = vunpack.c.h.b16 %v268
      %v1065 = vunpack.c.l.b16 %v269
      %v1066 = vunpack.c.h.b16 %v269
      %v1067 = vunpack.c.l.b16 %v270
      %v1068 = vunpack.c.l.b16 %v271
      %v1069 = vunpack.c.h.b16 %v271
      %v1070 = vunpack.c.l.b16 %v272
      %v1071 = vunpack.c.h.b16 %v272
      %v1072 = vunpack.c.l.b16 %v273
      %v1073 = vunpack.c.h.b16 %v273
      %v1074 = vunpack.c.l.b16 %v274
      %v1075 = vunpack.c.h.b16 %v274
      %v1076 = vunpack.c.l.b16 %v275
      %v1077 = vunpack.c.h.b16 %v275
      %v1078 = vunpack.c.l.b16 %v276
      %v1079 = vunpack.c.l.b16 %v277
      %v1080 = vunpack.c.h.b16 %v277
      %v1081 = vunpack.c.l.b16 %v278
      %v1082 = vunpack.c.h.b16 %v278
      %v1083 = vunpack.c.l.b16 %v279
      %v1084 = vunpack.c.h.b16 %v279
      %v1085 = vunpack.c.l.b16 %v280
      %v1086 = vunpack.c.h.b16 %v280
      %v1087 = vunpack.c.l.b16 %v281
      %v1088 = vunpack.c.h.b16 %v281
      %v1089 = vunpack.c.l.b16 %v282
      %v1090 = vunpack.c.l.b16 %v283
      %v1091 = vunpack.c.h.b16 %v283
      %v1092 = vunpack.c.l.b16 %v284
      %v1093 = vunpack.c.h.b16 %v284
      %v1094 = vunpack.c.l.b16 %v285
      %v1095 = vunpack.c.h.b16 %v285
      %v1096 = vunpack.c.l.b16 %v286
      %v1097 = vunpack.c.h.b16 %v286
      %v1098 = vunpack.c.l.b16 %v287
      %v1099 = vunpack.c.h.b16 %v287
      %v1100 = vunpack.c.l.b16 %v288
      %v1101 = vunpack.c.l.b16 %v289
      %v1102 = vunpack.c.h.b16 %v289
      %v1103 = vunpack.c.l.b16 %v290
      %v1104 = vunpack.c.h.b16 %v290
      %v1105 = vunpack.c.l.b16 %v291
      %v1106 = vunpack.c.h.b16 %v291
      %v1107 = vunpack.c.l.b16 %v292
      %v1108 = vunpack.c.h.b16 %v292
      %v1109 = vunpack.c.l.b16 %v293
      %v1110 = vunpack.c.h.b16 %v293
      %v1111 = vunpack.c.l.b16 %v294
      %v1112 = vunpack.c.l.b16 %v295
      %v1113 = vunpack.c.h.b16 %v295
      %v1114 = vunpack.c.l.b16 %v296
      %v1115 = vunpack.c.h.b16 %v296
      %v1116 = vunpack.c.l.b16 %v297
      %v1117 = vunpack.c.h.b16 %v297
      %v1118 = vunpack.c.l.b16 %v298
      %v1119 = vunpack.c.h.b16 %v298
      %v1120 = vunpack.c.l.b16 %v299
      %v1121 = vunpack.c.h.b16 %v299
      %v1122 = vunpack.c.l.b16 %v300
      %v1123 = vunpack.c.l.b16 %v301
      %v1124 = vunpack.c.h.b16 %v301
      %v1125 = vunpack.c.l.b16 %v302
      %v1126 = vunpack.c.h.b16 %v302
      %v1127 = vunpack.c.l.b16 %v303
      %v1128 = vunpack.c.h.b16 %v303
      %v1129 = vunpack.c.l.b16 %v304
      %v1130 = vunpack.c.h.b16 %v304
      %v1131 = vunpack.c.l.b16 %v305
      %v1132 = vunpack.c.h.b16 %v305
      %v1133 = vunpack.c.l.b16 %v306
      %v1134 = vunpack.c.l.b16 %v307
      %v1135 = vunpack.c.h.b16 %v307
      %v1136 = vunpack.c.l.b16 %v308
      %v1137 = vunpack.c.h.b16 %v308
      %v1138 = vunpack.c.l.b16 %v309
      %v1139 = vunpack.c.h.b16 %v309
      %v1140 = vunpack.c.l.b16 %v310
      %v1141 = vunpack.c.h.b16 %v310
      %v1142 = vunpack.c.l.b16 %v311
      %v1143 = vunpack.c.h.b16 %v311
      %v1144 = vunpack.c.l.b16 %v312
      %v1145 = vunpack.c.l.b16 %v313
      %v1146 = vunpack.c.h.b16 %v313
      %v1147 = vunpack.c.l.b16 %v314
      %v1148 = vunpack.c.h.b16 %v314
      %v1149 = vunpack.c.l.b16 %v315
      %v1150 = vunpack.c.h.b16 %v315
      %v1151 = vunpack.c.l.b16 %v316
      %v1152 = vunpack.c.h.b16 %v316
      %v1153 = vunpack.c.l.b16 %v317
      %v1154 = vunpack.c.h.b16 %v317
      %v1155 = vunpack.c.l.b16 %v318
      %v1156 = vunpack.c.l.b16 %v319
      %v1157 = vunpack.c.h.b16 %v319
      %v1158 = vunpack.c.l.b16 %v320
      %v1159 = vunpack.c.h.b16 %v320
      %v1160 = vunpack.c.l.b16 %v321
      %v1161 = vunpack.c.h.b16 %v321
      %v1162 = vunpack.c.l.b16 %v322
      %v1163 = vunpack.c.h.b16 %v322
      %v1164 = vunpack.c.l.b16 %v323
      %v1165 = vunpack.c.h.b16 %v323
      %v1166 = vunpack.c.l.b16 %v324
      %v1167 = vunpack.c.l.b16 %v325
      %v1168 = vunpack.c.h.b16 %v325
      %v1169 = vunpack.c.l.b16 %v326
      %v1170 = vunpack.c.h.b16 %v326
      %v1171 = vunpack.c.l.b16 %v327
      %v1172 = vunpack.c.h.b16 %v327
      %v1173 = vunpack.c.l.b16 %v328
      %v1174 = vunpack.c.h.b16 %v328
      %v1175 = vunpack.c.l.b16 %v329
      %v1176 = vunpack.c.h.b16 %v329
      %v1177 = vunpack.c.l.b16 %v330
      %v1178 = vunpack.c.l.b16 %v331
      %v1179 = vunpack.c.h.b16 %v331
      %v1180 = vunpack.c.l.b16 %v332
      %v1181 = vunpack.c.h.b16 %v332
      %v1182 = vunpack.c.l.b16 %v333
      %v1183 = vunpack.c.h.b16 %v333
      %v1184 = vunpack.c.l.b16 %v334
      %v1185 = vunpack.c.h.b16 %v334
      %v1186 = vunpack.c.l.b16 %v335
      %v1187 = vunpack.c.h.b16 %v335
      %v1188 = vunpack.c.l.b16 %v336
      %v1189 = vunpack.c.l.b16 %v337
      %v1190 = vunpack.c.h.b16 %v337
      %v1191 = vunpack.c.l.b16 %v338
      %v1192 = vunpack.c.h.b16 %v338
      %v1193 = vunpack.c.l.b16 %v339
      %v1194 = vunpack.c.h.b16 %v339
      %v1195 = vunpack.c.l.b16 %v340
      %v1196 = vunpack.c.h.b16 %v340
      %v1197 = vunpack.c.l.b16 %v341
      %v1198 = vunpack.c.h.b16 %v341
      %v1199 = vunpack.c.l.b16 %v342
      %v1200 = vunpack.c.l.b16 %v343
      %v1201 = vunpack.c.h.b16 %v343
      %v1202 = vunpack.c.l.b16 %v344
      %v1203 = vunpack.c.h.b16 %v344
      %v1204 = vunpack.c.l.b16 %v345
      %v1205 = vunpack.c.h.b16 %v345
      %v1206 = vunpack.c.l.b16 %v346
      %v1207 = vunpack.c.h.b16 %v346
      %v1208 = vunpack.c.l.b16 %v347
      %v1209 = vunpack.c.h.b16 %v347
      %v1210 = vunpack.c.l.b16 %v348
      %v1211 = vunpack.c.l.b16 %v349
      %v1212 = vunpack.c.h.b16 %v349
      %v1213 = vunpack.c.l.b16 %v350
      %v1214 = vunpack.c.h.b16 %v350
      %v1215 = vunpack.c.l.b16 %v351
      %v1216 = vunpack.c.h.b16 %v351
      %v1217 = vunpack.c.l.b16 %v352
      %v1218 = vunpack.c.h.b16 %v352
      %v1219 = vunpack.c.l.b16 %v353
      %v1220 = vunpack.c.h.b16 %v353
      %v1221 = vunpack.c.l.b16 %v354
      %v1222 = vunpack.c.l.b16 %v355
      %v1223 = vunpack.c.h.b16 %v355
      %v1224 = vunpack.c.l.b16 %v356
      %v1225 = vunpack.c.h.b16 %v356
      %v1226 = vunpack.c.l.b16 %v357
      %v1227 = vunpack.c.h.b16 %v357
      %v1228 = vunpack.c.l.b16 %v358
      %v1229 = vunpack.c.h.b16 %v358
      %v1230 = vunpack.c.l.b16 %v359
      %v1231 = vunpack.c.h.b16 %v359
      %v1232 = vunpack.c.l.b16 %v360
      %v1233 = vunpack.c.l.b16 %v361
      %v1234 = vunpack.c.h.b16 %v361
      %v1235 = vunpack.c.l.b16 %v362
      %v1236 = vunpack.c.h.b16 %v362
      %v1237 = vunpack.c.l.b16 %v363
      %v1238 = vunpack.c.h.b16 %v363
      %v1239 = vunpack.c.l.b16 %v364
      %v1240 = vunpack.c.h.b16 %v364
      %v1241 = vunpack.c.l.b16 %v365
      %v1242 = vunpack.c.h.b16 %v365
      %v1243 = vunpack.c.l.b16 %v366
      %v1244 = vunpack.c.l.b16 %v367
      %v1245 = vunpack.c.h.b16 %v367
      %v1246 = vunpack.c.l.b16 %v368
      %v1247 = vunpack.c.h.b16 %v368
      %v1248 = vunpack.c.l.b16 %v369
      %v1249 = vunpack.c.h.b16 %v369
      %v1250 = vunpack.c.l.b16 %v370
      %v1251 = vunpack.c.h.b16 %v370
      %v1252 = vunpack.c.l.b16 %v371
      %v1253 = vunpack.c.h.b16 %v371
      %v1254 = vunpack.c.l.b16 %v372
      %v1255 = vunpack.c.l.b16 %v373
      %v1256 = vunpack.c.h.b16 %v373
      %v1257 = vunpack.c.l.b16 %v374
      %v1258 = vunpack.c.h.b16 %v374
      %v1259 = vunpack.c.l.b16 %v375
      %v1260 = vunpack.c.h.b16 %v375
      %v1261 = vunpack.c.l.b16 %v376
      %v1262 = vunpack.c.h.b16 %v376
      %v1263 = vunpack.c.l.b16 %v377
      %v1264 = vunpack.c.h.b16 %v377
      %v1265 = vunpack.c.l.b16 %v378
      %v1266 = vunpack.c.l.b16 %v379
      %v1267 = vunpack.c.h.b16 %v379
      %v1268 = vunpack.c.l.b16 %v380
      %v1269 = vunpack.c.h.b16 %v380
      %v1270 = vunpack.c.l.b16 %v381
      %v1271 = vunpack.c.h.b16 %v381
      %v1272 = vunpack.c.l.b16 %v382
      %v1273 = vunpack.c.h.b16 %v382
      %v1274 = vunpack.c.l.b16 %v383
      %v1275 = vunpack.c.h.b16 %v383
      %v1276 = vunpack.c.l.b16 %v384
      %v1277 = vunpack.c.l.b16 %v385
      %v1278 = vunpack.c.h.b16 %v385
      %v1279 = vunpack.c.l.b16 %v386
      %v1280 = vunpack.c.h.b16 %v386
      %v1281 = vunpack.c.l.b16 %v387
      %v1282 = vunpack.c.h.b16 %v387
      %v1283 = vunpack.c.l.b16 %v388
      %v1284 = vunpack.c.h.b16 %v388
      %v1285 = vunpack.c.l.b16 %v389
      %v1286 = vunpack.c.h.b16 %v389
      %v1287 = vunpack.c.l.b16 %v390
      %v1288 = vunpack.c.l.b16 %v391
      %v1289 = vunpack.c.h.b16 %v391
      %v1290 = vunpack.c.l.b16 %v392
      %v1291 = vunpack.c.h.b16 %v392
      %v1292 = vunpack.c.l.b16 %v393
      %v1293 = vunpack.c.h.b16 %v393
      %v1294 = vunpack.c.l.b16 %v394
      %v1295 = vunpack.c.h.b16 %v394
      %v1296 = vunpack.c.l.b16 %v395
      %v1297 = vunpack.c.h.b16 %v395
      %v1298 = vunpack.c.l.b16 %v396
      %v1299 = vunpack.c.l.b16 %v397
      %v1300 = vunpack.c.h.b16 %v397
      %v1301 = vunpack.c.l.b16 %v398
      %v1302 = vunpack.c.h.b16 %v398
      %v1303 = vunpack.c.l.b16 %v399
      %v1304 = vunpack.c.h.b16 %v399
      %v1305 = vunpack.c.l.b16 %v400
      %v1306 = vunpack.c.h.b16 %v400
      %v1307 = vunpack.c.l.b16 %v401
      %v1308 = vunpack.c.h.b16 %v401
      %v1309 = vunpack.c.l.b16 %v402
      %v1310 = vunpack.c.l.b16 %v403
      %v1311 = vunpack.c.h.b16 %v403
      %v1312 = vunpack.c.l.b16 %v404
      %v1313 = vunpack.c.h.b16 %v404
      %v1314 = vunpack.c.l.b16 %v405
      %v1315 = vunpack.c.h.b16 %v405
      %v1316 = vunpack.c.l.b16 %v406
      %v1317 = vunpack.c.h.b16 %v406
      %v1318 = vunpack.c.l.b16 %v407
      %v1319 = vunpack.c.h.b16 %v407
      %v1320 = vunpack.c.l.b16 %v408
      %v1321 = vunpack.c.l.b16 %v409
      %v1322 = vunpack.c.h.b16 %v409
      %v1323 = vunpack.c.l.b16 %v410
      %v1324 = vunpack.c.h.b16 %v410
      %v1325 = vunpack.c.l.b16 %v411
      %v1326 = vunpack.c.h.b16 %v411
      %v1327 = vunpack.c.l.b16 %v412
      %v1328 = vunpack.c.h.b16 %v412
      %v1329 = vunpack.c.l.b16 %v413
      %v1330 = vunpack.c.h.b16 %v413
      %v1331 = vunpack.c.l.b16 %v414
      %v1332 = vunpack.c.l.b16 %v415
      %v1333 = vunpack.c.h.b16 %v415
      %v1334 = vunpack.c.l.b16 %v416
      %v1335 = vunpack.c.h.b16 %v416
      %v1336 = vunpack.c.l.b16 %v417
      %v1337 = vunpack.c.h.b16 %v417
      %v1338 = vunpack.c.l.b16 %v418
      %v1339 = vunpack.c.h.b16 %v418
      %v1340 = vunpack.c.l.b16 %v419
      %v1341 = vunpack.c.h.b16 %v419
      %v1342 = vunpack.c.l.b16 %v420
      %v1343 = vunpack.c.l.b16 %v421
      %v1344 = vunpack.c.h.b16 %v421
      %v1345 = vunpack.c.l.b16 %v422
      %v1346 = vunpack.c.h.b16 %v422
      %v1347 = vunpack.c.l.b16 %v423
      %v1348 = vunpack.c.h.b16 %v423
      %v1349 = vunpack.c.l.b16 %v424
      %v1350 = vunpack.c.h.b16 %v424
      %v1351 = vunpack.c.l.b16 %v425
      %v1352 = vunpack.c.h.b16 %v425
      %v1353 = vunpack.c.l.b16 %v426
      %v1354 = vunpack.c.l.b16 %v427
      %v1355 = vunpack.c.h.b16 %v427
      %v1356 = vunpack.c.l.b16 %v428
      %v1357 = vunpack.c.h.b16 %v428
      %v1358 = vunpack.c.l.b16 %v429
      %v1359 = vunpack.c.h.b16 %v429
      %v1360 = vunpack.c.l.b16 %v430
      %v1361 = vunpack.c.h.b16 %v430
      %v1362 = vunpack.c.l.b16 %v431
      %v1363 = vunpack.c.h.b16 %v431
      %v1364 = vunpack.c.l.b16 %v432
      %v1365 = vunpack.c.l.b16 %v433
      %v1366 = vunpack.c.h.b16 %v433
      %v1367 = vunpack.c.l.b16 %v434
      %v1368 = vunpack.c.h.b16 %v434
      %v1369 = vunpack.c.l.b16 %v435
      %v1370 = vunpack.c.h.b16 %v435
      %v1371 = vunpack.c.l.b16 %v436
      %v1372 = vunpack.c.h.b16 %v436
      %v1373 = vunpack.c.l.b16 %v437
      %v1374 = vunpack.c.h.b16 %v437
      %v1375 = vunpack.c.l.b16 %v438
      %v1376 = vunpack.c.l.b16 %v439
      %v1377 = vunpack.c.h.b16 %v439
      %v1378 = vunpack.c.l.b16 %v440
      %v1379 = vunpack.c.h.b16 %v440
      %v1380 = vunpack.c.l.b16 %v441
      %v1381 = vunpack.c.h.b16 %v441
      %v1382 = vunpack.c.l.b16 %v442
      %v1383 = vunpack.c.h.b16 %v442
      %v1384 = vunpack.c.l.b16 %v443
      %v1385 = vunpack.c.h.b16 %v443
      %v1386 = vunpack.c.l.b16 %v444
      %v1387 = vunpack.c.l.b16 %v445
      %v1388 = vunpack.c.h.b16 %v445
      %v1389 = vunpack.c.l.b16 %v446
      %v1390 = vunpack.c.h.b16 %v446
      %v1391 = vunpack.c.l.b16 %v447
      %v1392 = vunpack.c.h.b16 %v447
      %v1393 = vunpack.c.l.b16 %v448
      %v1394 = vunpack.c.h.b16 %v448
      %v1395 = vunpack.c.l.b16 %v449
      %v1396 = vunpack.c.h.b16 %v449
      %v1397 = vunpack.c.l.b16 %v450
      %v1398 = vunpack.c.l.b16 %v451
      %v1399 = vunpack.c.h.b16 %v451
      %v1400 = vunpack.c.l.b16 %v452
      %v1401 = vunpack.c.h.b16 %v452
      %v1402 = vunpack.c.l.b16 %v453
      %v1403 = vunpack.c.h.b16 %v453
      %v1404 = vunpack.c.l.b16 %v454
      %v1405 = vunpack.c.h.b16 %v454
      %v1406 = vunpack.c.l.b16 %v455
      %v1407 = vunpack.c.h.b16 %v455
      %v1408 = vunpack.c.l.b16 %v456
      %v1409 = vunpack.c.l.b16 %v457
      %v1410 = vunpack.c.h.b16 %v457
      %v1411 = vunpack.c.l.b16 %v458
      %v1412 = vunpack.c.h.b16 %v458
      %v1413 = vunpack.c.l.b16 %v459
      %v1414 = vunpack.c.h.b16 %v459
      %v1415 = vunpack.c.l.b16 %v460
      %v1416 = vunpack.c.h.b16 %v460
      %v1417 = vunpack.c.l.b16 %v461
      %v1418 = vunpack.c.h.b16 %v461
      %v1419 = vunpack.c.l.b16 %v462
      %v1420 = vunpack.c.l.b16 %v463
      %v1421 = vunpack.c.h.b16 %v463
      %v1422 = vunpack.c.l.b16 %v464
      %v1423 = vunpack.c.h.b16 %v464
      %v1424 = vunpack.c.l.b16 %v465
      %v1425 = vunpack.c.h.b16 %v465
      %v1426 = vunpack.c.l.b16 %v466
      %v1427 = vunpack.c.h.b16 %v466
      %v1428 = vunpack.c.l.b16 %v467
      %v1429 = vunpack.c.h.b16 %v467
      %v1430 = vunpack.c.l.b16 %v468
      %v1431 = vunpack.c.l.b16 %v469
      %v1432 = vunpack.c.h.b16 %v469
      %v1433 = vunpack.c.l.b16 %v470
      %v1434 = vunpack.c.h.b16 %v470
      %v1435 = vunpack.c.l.b16 %v471
      %v1436 = vunpack.c.h.b16 %v471
      %v1437 = vunpack.c.l.b16 %v472
      %v1438 = vunpack.c.h.b16 %v472
      %v1439 = vunpack.c.l.b16 %v473
      %v1440 = vunpack.c.h.b16 %v473
      %v1441 = vunpack.c.l.b16 %v474
      %v1442 = vunpack.c.l.b16 %v475
      %v1443 = vunpack.c.h.b16 %v475
      %v1444 = vunpack.c.l.b16 %v476
      %v1445 = vunpack.c.h.b16 %v476
      %v1446 = vunpack.c.l.b16 %v477
      %v1447 = vunpack.c.h.b16 %v477
      %v1448 = vunpack.c.l.b16 %v478
      %v1449 = vunpack.c.h.b16 %v478
      %v1450 = vunpack.c.l.b16 %v479
      %v1451 = vunpack.c.h.b16 %v479
      %v1452 = vunpack.c.l.b16 %v480
      %v1453 = vunpack.c.l.b16 %v481
      %v1454 = vunpack.c.h.b16 %v481
      %v1455 = vunpack.c.l.b16 %v482
      %v1456 = vunpack.c.h.b16 %v482
      %v1457 = vunpack.c.l.b16 %v483
      %v1458 = vunpack.c.h.b16 %v483
      %v1459 = vunpack.c.l.b16 %v484
      %v1460 = vunpack.c.h.b16 %v484
      %v1461 = vunpack.c.l.b16 %v485
      %v1462 = vunpack.c.h.b16 %v485
      %v1463 = vunpack.c.l.b16 %v486
      %v1464 = vunpack.c.l.b16 %v487
      %v1465 = vunpack.c.h.b16 %v487
      %v1466 = vunpack.c.l.b16 %v488
      %v1467 = vunpack.c.h.b16 %v488
      %v1468 = vunpack.c.l.b16 %v489
      %v1469 = vunpack.c.h.b16 %v489
      %v1470 = vunpack.c.l.b16 %v490
      %v1471 = vunpack.c.h.b16 %v490
      %v1472 = vunpack.c.l.b16 %v491
      %v1473 = vunpack.c.h.b16 %v491
      %v1474 = vunpack.c.l.b16 %v492
      %v1475 = vunpack.c.l.b16 %v493
      %v1476 = vunpack.c.h.b16 %v493
      %v1477 = vunpack.c.l.b16 %v494
      %v1478 = vunpack.c.h.b16 %v494
      %v1479 = vunpack.c.l.b16 %v495
      %v1480 = vunpack.c.h.b16 %v495
      %v1481 = vunpack.c.l.b16 %v496
      %v1482 = vunpack.c.h.b16 %v496
      %v1483 = vunpack.c.l.b16 %v497
      %v1484 = vunpack.c.h.b16 %v497
      %v1485 = vunpack.c.l.b16 %v498
      %v1486 = vunpack.c.l.b16 %v499
      %v1487 = vunpack.c.h.b16 %v499
      %v1488 = vunpack.c.l.b16 %v500
      %v1489 = vunpack.c.h.b16 %v500
      %v1490 = vunpack.c.l.b16 %v501
      %v1491 = vunpack.c.h.b16 %v501
      %v1492 = vunpack.c.l.b16 %v502
      %v1493 = vunpack.c.h.b16 %v502
      %v1494 = vunpack.c.l.b16 %v503
      %v1495 = vunpack.c.h.b16 %v503
      %v1496 = vunpack.c.l.b16 %v504
      %v1497 = vunpack.c.l.b16 %v505
      %v1498 = vunpack.c.h.b16 %v505
      %v1499 = vunpack.c.l.b16 %v506
      %v1500 = vunpack.c.h.b16 %v506
      %v1501 = vunpack.c.l.b16 %v507
      %v1502 = vunpack.c.h.b16 %v507
      %v1503 = vunpack.c.l.b16 %v508
      %v1504 = vunpack.c.h.b16 %v508
      %v1505 = vunpack.c.l.b16 %v509
      %v1506 = vunpack.c.h.b16 %v509
      %v1507 = vunpack.c.l.b16 %v510
      %v1508 = vunpack.c.l.b16 %v511
      %v1509 = vunpack.c.h.b16 %v511
      %v1510 = vunpack.c.l.b16 %v512
      %v1511 = vunpack.c.h.b16 %v512
      %v1512 = vunpack.c.l.b16 %v513
      %v1513 = vunpack.c.h.b16 %v513
      %v1514 = vunpack.c.l.b16 %v514
      %v1515 = vunpack.c.h.b16 %v514
      %v1516 = vunpack.c.l.b16 %v515
      %v1517 = vunpack.c.h.b16 %v515
      %v1518 = vunpack.c.l.b16 %v516
      %v1519 = vunpack.c.l.b16 %v517
      %v1520 = vunpack.c.h.b16 %v517
      %v1521 = vunpack.c.l.b16 %v518
      %v1522 = vunpack.c.h.b16 %v518
      %v1523 = vunpack.c.l.b16 %v519
      %v1524 = vunpack.c.h.b16 %v519
      %v1525 = vunpack.c.l.b16 %v520
      %v1526 = vunpack.c.h.b16 %v520
      %v1527 = vunpack.c.l.b16 %v521
      %v1528 = vunpack.c.h.b16 %v521
      %v1529 = vunpack.c.l.b16 %v522
      %v1530 = vunpack.c.l.b16 %v523
      %v1531 = vunpack.c.h.b16 %v523
      %v1532 = vunpack.c.l.b16 %v524
      %v1533 = vunpack.c.h.b16 %v524
      %v1534 = vunpack.c.l.b16 %v525
      %v1535 = vunpack.c.h.b16 %v525
      %v1536 = vunpack.c.l.b16 %v526
      %v1537 = vunpack.c.h.b16 %v526
      %v1538 = vunpack.c.l.b16 %v527
      %v1539 = vunpack.c.h.b16 %v527
      %v1540 = vunpack.c.l.b16 %v528
      %v1541 = vunpack.c.l.b16 %v529
      %v1542 = vunpack.c.h.b16 %v529
      %v1543 = vunpack.c.l.b16 %v530
      %v1544 = vunpack.c.h.b16 %v530
      %v1545 = vunpack.c.l.b16 %v531
      %v1546 = vunpack.c.h.b16 %v531
      %v1547 = vunpack.c.l.b16 %v532
      %v1548 = vunpack.c.h.b16 %v532
      %v1549 = vunpack.c.l.b16 %v533
      %v1550 = vunpack.c.h.b16 %v533
      %v1551 = vunpack.c.l.b16 %v534
      %v1552 = vunpack.c.l.b16 %v535
      %v1553 = vunpack.c.h.b16 %v535
      %v1554 = vunpack.c.l.b16 %v536
      %v1555 = vunpack.c.h.b16 %v536
      %v1556 = vunpack.c.l.b16 %v537
      %v1557 = vunpack.c.h.b16 %v537
      %v1558 = vunpack.c.l.b16 %v538
      %v1559 = vunpack.c.h.b16 %v538
      %v1560 = vunpack.c.l.b16 %v539
      %v1561 = vunpack.c.h.b16 %v539
      %v1562 = vunpack.c.l.b16 %v540
      %v1563 = vunpack.c.l.b16 %v541
      %v1564 = vunpack.c.h.b16 %v541
      %v1565 = vunpack.c.l.b16 %v542
      %v1566 = vunpack.c.h.b16 %v542
      %v1567 = vunpack.c.l.b16 %v543
      %v1568 = vunpack.c.h.b16 %v543
      %v1569 = vunpack.c.l.b16 %v544
      %v1570 = vunpack.c.h.b16 %v544
      %v1571 = vunpack.c.l.b16 %v545
      %v1572 = vunpack.c.h.b16 %v545
      %v1573 = vunpack.c.l.b16 %v546
      %v1574 = vunpack.c.l.b16 %v547
      %v1575 = vunpack.c.h.b16 %v547
      %v1576 = vunpack.c.l.b16 %v548
      %v1577 = vunpack.c.h.b16 %v548
      %v1578 = vunpack.c.l.b16 %v549
      %v1579 = vunpack.c.h.b16 %v549
      %v1580 = vunpack.c.l.b16 %v550
      %v1581 = vunpack.c.h.b16 %v550
      %v1582 = vunpack.c.l.b16 %v551
      %v1583 = vunpack.c.h.b16 %v551
      %v1584 = vunpack.c.l.b16 %v552
      %v1585 = vunpack.c.l.b16 %v553
      %v1586 = vunpack.c.h.b16 %v553
      %v1587 = vunpack.c.l.b16 %v554
      %v1588 = vunpack.c.h.b16 %v554
      %v1589 = vunpack.c.l.b16 %v555
      %v1590 = vunpack.c.h.b16 %v555
      %v1591 = vunpack.c.l.b16 %v556
      %v1592 = vunpack.c.h.b16 %v556
      %v1593 = vunpack.c.l.b16 %v557
      %v1594 = vunpack.c.h.b16 %v557
      %v1595 = vunpack.c.l.b16 %v558
      %v1596 = vunpack.c.l.b16 %v559
      %v1597 = vunpack.c.h.b16 %v559
      %v1598 = vunpack.c.l.b16 %v560
      %v1599 = vunpack.c.h.b16 %v560
      %v1600 = vunpack.c.l.b16 %v561
      %v1601 = vunpack.c.h.b16 %v561
      %v1602 = vunpack.c.l.b16 %v562
      %v1603 = vunpack.c.h.b16 %v562
      %v1604 = vunpack.c.l.b16 %v563
      %v1605 = vunpack.c.h.b16 %v563
      %v1606 = vunpack.c.l.b16 %v564
      %v1607 = vunpack.c.l.b16 %v565
      %v1608 = vunpack.c.h.b16 %v565
      %v1609 = vunpack.c.l.b16 %v566
      %v1610 = vunpack.c.h.b16 %v566
      %v1611 = vunpack.c.l.b16 %v567
      %v1612 = vunpack.c.h.b16 %v567
      %v1613 = vunpack.c.l.b16 %v568
      %v1614 = vunpack.c.h.b16 %v568
      %v1615 = vunpack.c.l.b16 %v569
      %v1616 = vunpack.c.h.b16 %v569
      %v1617 = vunpack.c.l.b16 %v570
      %v1618 = vunpack.c.l.b16 %v571
      %v1619 = vunpack.c.h.b16 %v571
      %v1620 = vunpack.c.l.b16 %v572
      %v1621 = vunpack.c.h.b16 %v572
      %v1622 = vunpack.c.l.b16 %v573
      %v1623 = vunpack.c.h.b16 %v573
      %v1624 = vunpack.c.l.b16 %v574
      %v1625 = vunpack.c.h.b16 %v574
      %v1626 = vunpack.c.l.b16 %v575
      %v1627 = vunpack.c.h.b16 %v575
      %v1628 = vunpack.c.l.b16 %v576
      %v1629 = vunpack.c.l.b16 %v577
      %v1630 = vunpack.c.h.b16 %v577
      %v1631 = vunpack.c.l.b16 %v578
      %v1632 = vunpack.c.h.b16 %v578
      %v1633 = vunpack.c.l.b16 %v579
      %v1634 = vunpack.c.h.b16 %v579
      %v1635 = vunpack.c.l.b16 %v580
      %v1636 = vunpack.c.h.b16 %v580
      %v1637 = vunpack.c.l.b16 %v581
      %v1638 = vunpack.c.h.b16 %v581
      %v1639 = vunpack.c.l.b16 %v582
      %v1640 = vunpack.c.l.b16 %v583
      %v1641 = vunpack.c.h.b16 %v583
      %v1642 = vunpack.c.l.b16 %v584
      %v1643 = vunpack.c.h.b16 %v584
      %v1644 = vunpack.c.l.b16 %v585
      %v1645 = vunpack.c.h.b16 %v585
      %v1646 = vunpack.c.l.b16 %v586
      %v1647 = vunpack.c.h.b16 %v586
      %v1648 = vunpack.c.l.b16 %v587
      %v1649 = vunpack.c.h.b16 %v587
      %v1650 = vunpack.c.l.b16 %v588
      %v1651 = vunpack.c.l.b16 %v589
      %v1652 = vunpack.c.h.b16 %v589
      %v1653 = vunpack.c.l.b16 %v590
      %v1654 = vunpack.c.h.b16 %v590
      %v1655 = vunpack.c.l.b16 %v591
      %v1656 = vunpack.c.h.b16 %v591
      %v1657 = vunpack.c.l.b16 %v592
      %v1658 = vunpack.c.h.b16 %v592
      %v1659 = vunpack.c.l.b16 %v593
      %v1660 = vunpack.c.h.b16 %v593
      %v1661 = vunpack.c.l.b16 %v594
      %v1662 = vunpack.c.l.b16 %v595
      %v1663 = vunpack.c.h.b16 %v595
      %v1664 = vunpack.c.l.b16 %v596
      %v1665 = vunpack.c.h.b16 %v596
      %v1666 = vunpack.c.l.b16 %v597
      %v1667 = vunpack.c.h.b16 %v597
      %v1668 = vunpack.c.l.b16 %v598
      %v1669 = vunpack.c.h.b16 %v598
      %v1670 = vunpack.c.l.b16 %v599
      %v1671 = vunpack.c.h.b16 %v599
      %v1672 = vunpack.c.l.b16 %v600
      %v1673 = vunpack.c.l.b16 %v601
      %v1674 = vunpack.c.h.b16 %v601
      %v1675 = vunpack.c.l.b16 %v602
      %v1676 = vunpack.c.h.b16 %v602
      %v1677 = vunpack.c.l.b16 %v603
      %v1678 = vunpack.c.h.b16 %v603
      %v1679 = vunpack.c.l.b16 %v604
      %v1680 = vunpack.c.h.b16 %v604
      %v1681 = vunpack.c.l.b16 %v605
      %v1682 = vunpack.c.h.b16 %v605
      %v1683 = vunpack.c.l.b16 %v606
      %v1684 = vunpack.c.l.b16 %v607
      %v1685 = vunpack.c.h.b16 %v607
      %v1686 = vunpack.c.l.b16 %v608
      %v1687 = vunpack.c.h.b16 %v608
      %v1688 = vunpack.c.l.b16 %v609
      %v1689 = vunpack.c.h.b16 %v609
      %v1690 = vunpack.c.l.b16 %v610
      %v1691 = vunpack.c.h.b16 %v610
      %v1692 = vunpack.c.l.b16 %v611
      %v1693 = vunpack.c.h.b16 %v611
      %v1694 = vunpack.c.l.b16 %v612
      %v1695 = vunpack.c.l.b16 %v613
      %v1696 = vunpack.c.h.b16 %v613
      %v1697 = vunpack.c.l.b16 %v614
      %v1698 = vunpack.c.h.b16 %v614
      %v1699 = vunpack.c.l.b16 %v615
      %v1700 = vunpack.c.h.b16 %v615
      %v1701 = vunpack.c.l.b16 %v616
      %v1702 = vunpack.c.h.b16 %v616
      %v1703 = vunpack.c.l.b16 %v617
      %v1704 = vunpack.c.h.b16 %v617
      %v1705 = vunpack.c.l.b16 %v618
      %v1706 = vunpack.c.l.b16 %v619
      %v1707 = vunpack.c.h.b16 %v619
      %v1708 = vunpack.c.l.b16 %v620
      %v1709 = vunpack.c.h.b16 %v620
      %v1710 = vunpack.c.l.b16 %v621
      %v1711 = vunpack.c.h.b16 %v621
      %v1712 = vunpack.c.l.b16 %v622
      %v1713 = vunpack.c.h.b16 %v622
      %v1714 = vunpack.c.l.b16 %v623
      %v1715 = vunpack.c.h.b16 %v623
      %v1716 = vunpack.c.l.b16 %v624
      %v1717 = vunpack.c.l.b16 %v625
      %v1718 = vunpack.c.h.b16 %v625
      %v1719 = vunpack.c.l.b16 %v626
      %v1720 = vunpack.c.h.b16 %v626
      %v1721 = vunpack.c.l.b16 %v627
      %v1722 = vunpack.c.h.b16 %v627
      %v1723 = vunpack.c.l.b16 %v628
      %v1724 = vunpack.c.h.b16 %v628
      %v1725 = vunpack.c.l.b16 %v629
      %v1726 = vunpack.c.h.b16 %v629
      %v1727 = vunpack.c.l.b16 %v630
      %v1728 = vunpack.c.l.b16 %v631
      %v1729 = vunpack.c.h.b16 %v631
      %v1730 = vunpack.c.l.b16 %v632
      %v1731 = vunpack.c.h.b16 %v632
      %v1732 = vunpack.c.l.b16 %v633
      %v1733 = vunpack.c.h.b16 %v633
      %v1734 = vunpack.c.l.b16 %v634
      %v1735 = vunpack.c.h.b16 %v634
      %v1736 = vunpack.c.l.b16 %v635
      %v1737 = vunpack.c.h.b16 %v635
      %v1738 = vunpack.c.l.b16 %v636
      %v1739 = vpack.c.b16 %v1046, %v1035
      %v1740 = vpack.c.b16 %v1047, %v1036
      %v1741 = vpack.c.b16 %v1048, %v1037
      %v1742 = vpack.c.b16 %v1049, %v1038
      %v1743 = vpack.c.b16 %v1050, %v1039
      %v1744 = vpack.c.b16 %v1051, %v1040
      %v1745 = vpack.c.b16 %v1052, %v1041
      %v1746 = vpack.c.b16 %v1053, %v1042
      %v1747 = vpack.c.b16 %v1054, %v1043
      %v1748 = vpack.c.b16 %v1055, %v1044
      %v1749 = vpack.c.b16 %v1056, %v1045
      %v1750 = vpack.c.b16 %v1068, %v1057
      %v1751 = vpack.c.b16 %v1069, %v1058
      %v1752 = vpack.c.b16 %v1070, %v1059
      %v1753 = vpack.c.b16 %v1071, %v1060
      %v1754 = vpack.c.b16 %v1072, %v1061
      %v1755 = vpack.c.b16 %v1073, %v1062
      %v1756 = vpack.c.b16 %v1074, %v1063
      %v1757 = vpack.c.b16 %v1075, %v1064
      %v1758 = vpack.c.b16 %v1076, %v1065
      %v1759 = vpack.c.b16 %v1077, %v1066
      %v1760 = vpack.c.b16 %v1078, %v1067
      %v1761 = vpack.c.b16 %v1090, %v1079
      %v1762 = vpack.c.b16 %v1091, %v1080
      %v1763 = vpack.c.b16 %v1092, %v1081
      %v1764 = vpack.c.b16 %v1093, %v1082
      %v1765 = vpack.c.b16 %v1094, %v1083
      %v1766 = vpack.c.b16 %v1095, %v1084
      %v1767 = vpack.c.b16 %v1096, %v1085
      %v1768 = vpack.c.b16 %v1097, %v1086
      %v1769 = vpack.c.b16 %v1098, %v1087
      %v1770 = vpack.c.b16 %v1099, %v1088
      %v1771 = vpack.c.b16 %v1100, %v1089
      %v1772 = vpack.c.b16 %v1112, %v1101
      %v1773 = vpack.c.b16 %v1113, %v1102
      %v1774 = vpack.c.b16 %v1114, %v1103
      %v1775 = vpack.c.b16 %v1115, %v1104
      %v1776 = vpack.c.b16 %v1116, %v1105
      %v1777 = vpack.c.b16 %v1117, %v1106
      %v1778 = vpack.c.b16 %v1118, %v1107
      %v1779 = vpack.c.b16 %v1119, %v1108
      %v1780 = vpack.c.b16 %v1120, %v1109
      %v1781 = vpack.c.b16 %v1121, %v1110
      %v1782 = vpack.c.b16 %v1122, %v1111
      %v1783 = vpack.c.b16 %v1134, %v1123
      %v1784 = vpack.c.b16 %v1135, %v1124
      %v1785 = vpack.c.b16 %v1136, %v1125
      %v1786 = vpack.c.b16 %v1137, %v1126
      %v1787 = vpack.c.b16 %v1138, %v1127
      %v1788 = vpack.c.b16 %v1139, %v1128
      %v1789 = vpack.c.b16 %v1140, %v1129
      %v1790 = vpack.c.b16 %v1141, %v1130
      %v1791 = vpack.c.b16 %v1142, %v1131
      %v1792 = vpack.c.b16 %v1143, %v1132
      %v1793 = vpack.c.b16 %v1144, %v1133
      %v1794 = vpack.c.b16 %v1156, %v1145
      %v1795 = vpack.c.b16 %v1157, %v1146
      %v1796 = vpack.c.b16 %v1158, %v1147
      %v1797 = vpack.c.b16 %v1159, %v1148
      %v1798 = vpack.c.b16 %v1160, %v1149
      %v1799 = vpack.c.b16 %v1161, %v1150
      %v1800 = vpack.c.b16 %v1162, %v1151
      %v1801 = vpack.c.b16 %v1163, %v1152
      %v1802 = vpack.c.b16 %v1164, %v1153
      %v1803 = vpack.c.b16 %v1165, %v1154
      %v1804 = vpack.c.b16 %v1166, %v1155
      %v1805 = vpack.c.b16 %v1178, %v1167
      %v1806 = vpack.c.b16 %v1179, %v1168
      %v1807 = vpack.c.b16 %v1180, %v1169
      %v1808 = vpack.c.b16 %v1181, %v1170
      %v1809 = vpack.c.b16 %v1182, %v1171
      %v1810 = vpack.c.b16 %v1183, %v1172
      %v1811 = vpack.c.b16 %v1184, %v1173
      %v1812 = vpack.c.b16 %v1185, %v1174
      %v1813 = vpack.c.b16 %v1186, %v1175
      %v1814 = vpack.c.b16 %v1187, %v1176
      %v1815 = vpack.c.b16 %v1188, %v1177
      %v1816 = vpack.c.b16 %v1200, %v1189
      %v1817 = vpack.c.b16 %v1201, %v1190
      %v1818 = vpack.c.b16 %v1202, %v1191
      %v1819 = vpack.c.b16 %v1203, %v1192
      %v1820 = vpack.c.b16 %v1204, %v1193
      %v1821 = vpack.c.b16 %v1205, %v1194
      %v1822 = vpack.c.b16 %v1206, %v1195
      %v1823 = vpack.c.b16 %v1207, %v1196
      %v1824 = vpack.c.b16 %v1208, %v1197
      %v1825 = vpack.c.b16 %v1209, %v1198
      %v1826 = vpack.c.b16 %v1210, %v1199
      %v1827 = vpack.c.b16 %v1222, %v1211
      %v1828 = vpack.c.b16 %v1223, %v1212
      %v1829 = vpack.c.b16 %v1224, %v1213
      %v1830 = vpack.c.b16 %v1225, %v1214
      %v1831 = vpack.c.b16 %v1226, %v1215
      %v1832 = vpack.c.b16 %v1227, %v1216
      %v1833 = vpack.c.b16 %v1228, %v1217
      %v1834 = vpack.c.b16 %v1229, %v1218
      %v1835 = vpack.c.b16 %v1230, %v1219
      %v1836 = vpack.c.b16 %v1231, %v1220
      %v1837 = vpack.c.b16 %v1232, %v1221
      %v1838 = vpack.c.b16 %v1244, %v1233
      %v1839 = vpack.c.b16 %v1245, %v1234
      %v1840 = vpack.c.b16 %v1246, %v1235
      %v1841 = vpack.c.b16 %v1247, %v1236
      %v1842 = vpack.c.b16 %v1248, %v1237
      %v1843 = vpack.c.b16 %v1249, %v1238
      %v1844 = vpack.c.b16 %v1250, %v1239
      %v1845 = vpack.c.b16 %v1251, %v1240
      %v1846 = vpack.c.b16 %v1252, %v1241
      %v1847 = vpack.c.b16 %v1253, %v1242
      %v1848 = vpack.c.b16 %v1254, %v1243
      %v1849 = vpack.c.b16 %v1266, %v1255
      %v1850 = vpack.c.b16 %v1267, %v1256
      %v1851 = vpack.c.b16 %v1268, %v1257
      %v1852 = vpack.c.b16 %v1269, %v1258
      %v1853 = vpack.c.b16 %v1270, %v1259
      %v1854 = vpack.c.b16 %v1271, %v1260
      %v1855 = vpack.c.b16 %v1272, %v1261
      %v1856 = vpack.c.b16 %v1273, %v1262
      %v1857 = vpack.c.b16 %v1274, %v1263
      %v1858 = vpack.c.b16 %v1275, %v1264
      %v1859 = vpack.c.b16 %v1276, %v1265
      %v1860 = vpack.c.b16 %v1288, %v1277
      %v1861 = vpack.c.b16 %v1289, %v1278
      %v1862 = vpack.c.b16 %v1290, %v1279
      %v1863 = vpack.c.b16 %v1291, %v1280
      %v1864 = vpack.c.b16 %v1292, %v1281
      %v1865 = vpack.c.b16 %v1293, %v1282
      %v1866 = vpack.c.b16 %v1294, %v1283
      %v1867 = vpack.c.b16 %v1295, %v1284
      %v1868 = vpack.c.b16 %v1296, %v1285
      %v1869 = vpack.c.b16 %v1297, %v1286
      %v1870 = vpack.c.b16 %v1298, %v1287
      %v1871 = vpack.c.b16 %v1310, %v1299
      %v1872 = vpack.c.b16 %v1311, %v1300
      %v1873 = vpack.c.b16 %v1312, %v1301
      %v1874 = vpack.c.b16 %v1313, %v1302
      %v1875 = vpack.c.b16 %v1314, %v1303
      %v1876 = vpack.c.b16 %v1315, %v1304
      %v1877 = vpack.c.b16 %v1316, %v1305
      %v1878 = vpack.c.b16 %v1317, %v1306
      %v1879 = vpack.c.b16 %v1318, %v1307
      %v1880 = vpack.c.b16 %v1319, %v1308
      %v1881 = vpack.c.b16 %v1320, %v1309
      %v1882 = vpack.c.b16 %v1332, %v1321
      %v1883 = vpack.c.b16 %v1333, %v1322
      %v1884 = vpack.c.b16 %v1334, %v1323
      %v1885 = vpack.c.b16 %v1335, %v1324
      %v1886 = vpack.c.b16 %v1336, %v1325
      %v1887 = vpack.c.b16 %v1337, %v1326
      %v1888 = vpack.c.b16 %v1338, %v1327
      %v1889 = vpack.c.b16 %v1339, %v1328
      %v1890 = vpack.c.b16 %v1340, %v1329
      %v1891 = vpack.c.b16 %v1341, %v1330
      %v1892 = vpack.c.b16 %v1342, %v1331
      %v1893 = vpack.c.b16 %v1354, %v1343
      %v1894 = vpack.c.b16 %v1355, %v1344
      %v1895 = vpack.c.b16 %v1356, %v1345
      %v1896 = vpack.c.b16 %v1357, %v1346
      %v1897 = vpack.c.b16 %v1358, %v1347
      %v1898 = vpack.c.b16 %v1359, %v1348
      %v1899 = vpack.c.b16 %v1360, %v1349
      %v1900 = vpack.c.b16 %v1361, %v1350
      %v1901 = vpack.c.b16 %v1362, %v1351
      %v1902 = vpack.c.b16 %v1363, %v1352
      %v1903 = vpack.c.b16 %v1364, %v1353
      %v1904 = vpack.c.b16 %v1376, %v1365
      %v1905 = vpack.c.b16 %v1377, %v1366
      %v1906 = vpack.c.b16 %v1378, %v1367
      %v1907 = vpack.c.b16 %v1379, %v1368
      %v1908 = vpack.c.b16 %v1380, %v1369
      %v1909 = vpack.c.b16 %v1381, %v1370
      %v1910 = vpack.c.b16 %v1382, %v1371
      %v1911 = vpack.c.b16 %v1383, %v1372
      %v1912 = vpack.c.b16 %v1384, %v1373
      %v1913 = vpack.c.b16 %v1385, %v1374
      %v1914 = vpack.c.b16 %v1386, %v1375
      %v1915 = vpack.c.b16 %v1398, %v1387
      %v1916 = vpack.c.b16 %v1399, %v1388
      %v1917 = vpack.c.b16 %v1400, %v1389
      %v1918 = vpack.c.b16 %v1401, %v1390
      %v1919 = vpack.c.b16 %v1402, %v1391
      %v1920 = vpack.c.b16 %v1403, %v1392
      %v1921 = vpack.c.b16 %v1404, %v1393
      %v1922 = vpack.c.b16 %v1405, %v1394
      %v1923 = vpack.c.b16 %v1406, %v1395
      %v1924 = vpack.c.b16 %v1407, %v1396
      %v1925 = vpack.c.b16 %v1408, %v1397
      %v1926 = vpack.c.b16 %v1420, %v1409
      %v1927 = vpack.c.b16 %v1421, %v1410
      %v1928 = vpack.c.b16 %v1422, %v1411
      %v1929 = vpack.c.b16 %v1423, %v1412
      %v1930 = vpack.c.b16 %v1424, %v1413
      %v1931 = vpack.c.b16 %v1425, %v1414
      %v1932 = vpack.c.b16 %v1426, %v1415
      %v1933 = vpack.c.b16 %v1427, %v1416
      %v1934 = vpack.c.b16 %v1428, %v1417
      %v1935 = vpack.c.b16 %v1429, %v1418
      %v1936 = vpack.c.b16 %v1430, %v1419
      %v1937 = vpack.c.b16 %v1442, %v1431
      %v1938 = vpack.c.b16 %v1443, %v1432
      %v1939 = vpack.c.b16 %v1444, %v1433
      %v1940 = vpack.c.b16 %v1445, %v1434
      %v1941 = vpack.c.b16 %v1446, %v1435
      %v1942 = vpack.c.b16 %v1447, %v1436
      %v1943 = vpack.c.b16 %v1448, %v1437
      %v1944 = vpack.c.b16 %v1449, %v1438
      %v1945 = vpack.c.b16 %v1450, %v1439
      %v1946 = vpack.c.b16 %v1451, %v1440
      %v1947 = vpack.c.b16 %v1452, %v1441
      %v1948 = vpack.c.b16 %v1464, %v1453
      %v1949 = vpack.c.b16 %v1465, %v1454
      %v1950 = vpack.c.b16 %v1466, %v1455
      %v1951 = vpack.c.b16 %v1467, %v1456
      %v1952 = vpack.c.b16 %v1468, %v1457
      %v1953 = vpack.c.b16 %v1469, %v1458
      %v1954 = vpack.c.b16 %v1470, %v1459
      %v1955 = vpack.c.b16 %v1471, %v1460
      %v1956 = vpack.c.b16 %v1472, %v1461
      %v1957 = vpack.c.b16 %v1473, %v1462
      %v1958 = vpack.c.b16 %v1474, %v1463
      %v1959 = vpack.c.b16 %v1486, %v1475
      %v1960 = vpack.c.b16 %v1487, %v1476
      %v1961 = vpack.c.b16 %v1488, %v1477
      %v1962 = vpack.c.b16 %v1489, %v1478
      %v1963 = vpack.c.b16 %v1490, %v1479
      %v1964 = vpack.c.b16 %v1491, %v1480
      %v1965 = vpack.c.b16 %v1492, %v1481
      %v1966 = vpack.c.b16 %v1493, %v1482
      %v1967 = vpack.c.b16 %v1494, %v1483
      %v1968 = vpack.c.b16 %v1495, %v1484
      %v1969 = vpack.c.b16 %v1496, %v1485
      %v1970 = vpack.c.b16 %v1508, %v1497
      %v1971 = vpack.c.b16 %v1509, %v1498
      %v1972 = vpack.c.b16 %v1510, %v1499
      %v1973 = vpack.c.b16 %v1511, %v1500
      %v1974 = vpack.c.b16 %v1512, %v1501
      %v1975 = vpack.c.b16 %v1513, %v1502
      %v1976 = vpack.c.b16 %v1514, %v1503
      %v1977 = vpack.c.b16 %v1515, %v1504
      %v1978 = vpack.c.b16 %v1516, %v1505
      %v1979 = vpack.c.b16 %v1517, %v1506
      %v1980 = vpack.c.b16 %v1518, %v1507
      %v1981 = vpack.c.b16 %v1530, %v1519
      %v1982 = vpack.c.b16 %v1531, %v1520
      %v1983 = vpack.c.b16 %v1532, %v1521
      %v1984 = vpack.c.b16 %v1533, %v1522
      %v1985 = vpack.c.b16 %v1534, %v1523
      %v1986 = vpack.c.b16 %v1535, %v1524
      %v1987 = vpack.c.b16 %v1536, %v1525
      %v1988 = vpack.c.b16 %v1537, %v1526
      %v1989 = vpack.c.b16 %v1538, %v1527
      %v1990 = vpack.c.b16 %v1539, %v1528
      %v1991 = vpack.c.b16 %v1540, %v1529
      %v1992 = vpack.c.b16 %v1552, %v1541
      %v1993 = vpack.c.b16 %v1553, %v1542
      %v1994 = vpack.c.b16 %v1554, %v1543
      %v1995 = vpack.c.b16 %v1555, %v1544
      %v1996 = vpack.c.b16 %v1556, %v1545
      %v1997 = vpack.c.b16 %v1557, %v1546
      %v1998 = vpack.c.b16 %v1558, %v1547
      %v1999 = vpack.c.b16 %v1559, %v1548
      %v2000 = vpack.c.b16 %v1560, %v1549
      %v2001 = vpack.c.b16 %v1561, %v1550
      %v2002 = vpack.c.b16 %v1562, %v1551
      %v2003 = vpack.c.b16 %v1574, %v1563
      %v2004 = vpack.c.b16 %v1575, %v1564
      %v2005 = vpack.c.b16 %v1576, %v1565
      %v2006 = vpack.c.b16 %v1577, %v1566
      %v2007 = vpack.c.b16 %v1578, %v1567
      %v2008 = vpack.c.b16 %v1579, %v1568
      %v2009 = vpack.c.b16 %v1580, %v1569
      %v2010 = vpack.c.b16 %v1581, %v1570
      %v2011 = vpack.c.b16 %v1582, %v1571
      %v2012 = vpack.c.b16 %v1583, %v1572
      %v2013 = vpack.c.b16 %v1584, %v1573
      %v2014 = vpack.c.b16 %v1596, %v1585
      %v2015 = vpack.c.b16 %v1597, %v1586
      %v2016 = vpack.c.b16 %v1598, %v1587
      %v2017 = vpack.c.b16 %v1599, %v1588
      %v2018 = vpack.c.b16 %v1600, %v1589
      %v2019 = vpack.c.b16 %v1601, %v1590
      %v2020 = vpack.c.b16 %v1602, %v1591
      %v2021 = vpack.c.b16 %v1603, %v1592
      %v2022 = vpack.c.b16 %v1604, %v1593
      %v2023 = vpack.c.b16 %v1605, %v1594
      %v2024 = vpack.c.b16 %v1606, %v1595
      %v2025 = vpack.c.b16 %v1618, %v1607
      %v2026 = vpack.c.b16 %v1619, %v1608
      %v2027 = vpack.c.b16 %v1620, %v1609
      %v2028 = vpack.c.b16 %v1621, %v1610
      %v2029 = vpack.c.b16 %v1622, %v1611
      %v2030 = vpack.c.b16 %v1623, %v1612
      %v2031 = vpack.c.b16 %v1624, %v1613
      %v2032 = vpack.c.b16 %v1625, %v1614
      %v2033 = vpack.c.b16 %v1626, %v1615
      %v2034 = vpack.c.b16 %v1627, %v1616
      %v2035 = vpack.c.b16 %v1628, %v1617
      %v2036 = vpack.c.b16 %v1640, %v1629
      %v2037 = vpack.c.b16 %v1641, %v1630
      %v2038 = vpack.c.b16 %v1642, %v1631
      %v2039 = vpack.c.b16 %v1643, %v1632
      %v2040 = vpack.c.b16 %v1644, %v1633
      %v2041 = vpack.c.b16 %v1645, %v1634
      %v2042 = vpack.c.b16 %v1646, %v1635
      %v2043 = vpack.c.b16 %v1647, %v1636
      %v2044 = vpack.c.b16 %v1648, %v1637
      %v2045 = vpack.c.b16 %v1649, %v1638
      %v2046 = vpack.c.b16 %v1650, %v1639
      %v2047 = vpack.c.b16 %v1662, %v1651
      %v2048 = vpack.c.b16 %v1663, %v1652
      %v2049 = vpack.c.b16 %v1664, %v1653
      %v2050 = vpack.c.b16 %v1665, %v1654
      %v2051 = vpack.c.b16 %v1666, %v1655
      %v2052 = vpack.c.b16 %v1667, %v1656
      %v2053 = vpack.c.b16 %v1668, %v1657
      %v2054 = vpack.c.b16 %v1669, %v1658
      %v2055 = vpack.c.b16 %v1670, %v1659
      %v2056 = vpack.c.b16 %v1671, %v1660
      %v2057 = vpack.c.b16 %v1672, %v1661
      %v2058 = vpack.c.b16 %v1684, %v1673
      %v2059 = vpack.c.b16 %v1685, %v1674
      %v2060 = vpack.c.b16 %v1686, %v1675
      %v2061 = vpack.c.b16 %v1687, %v1676
      %v2062 = vpack.c.b16 %v1688, %v1677
      %v2063 = vpack.c.b16 %v1689, %v1678
      %v2064 = vpack.c.b16 %v1690, %v1679
      %v2065 = vpack.c.b16 %v1691, %v1680
      %v2066 = vpack.c.b16 %v1692, %v1681
      %v2067 = vpack.c.b16 %v1693, %v1682
      %v2068 = vpack.c.b16 %v1694, %v1683
      %v2069 = vpack.c.b16 %v1706, %v1695
      %v2070 = vpack.c.b16 %v1707, %v1696
      %v2071 = vpack.c.b16 %v1708, %v1697
      %v2072 = vpack.c.b16 %v1709, %v1698
      %v2073 = vpack.c.b16 %v1710, %v1699
      %v2074 = vpack.c.b16 %v1711, %v1700
      %v2075 = vpack.c.b16 %v1712, %v1701
      %v2076 = vpack.c.b16 %v1713, %v1702
      %v2077 = vpack.c.b16 %v1714, %v1703
      %v2078 = vpack.c.b16 %v1715, %v1704
      %v2079 = vpack.c.b16 %v1716, %v1705
      %v2080 = vpack.c.b16 %v1728, %v1717
      %v2081 = vpack.c.b16 %v1729, %v1718
      %v2082 = vpack.c.b16 %v1730, %v1719
      %v2083 = vpack.c.b16 %v1731, %v1720
      %v2084 = vpack.c.b16 %v1732, %v1721
      %v2085 = vpack.c.b16 %v1733, %v1722
      %v2086 = vpack.c.b16 %v1734, %v1723
      %v2087 = vpack.c.b16 %v1735, %v1724
      %v2088 = vpack.c.b16 %v1736, %v1725
      %v2089 = vpack.c.b16 %v1737, %v1726
      %v2090 = vpack.c.b16 %v1738, %v1727
      %2443 = vmatprep.subr.bf16.mxu0 %v1740
      %2444 = vmatpush1.bf16.msra.mxu0 %v1739
      %2445 = vmatprep.subr.bf16.mxu0 %v1751
      %2446 = vmatpush1.bf16.msra.mxu0 %v1750
      %2447 = vmatprep.subr.bf16.mxu0 %v1762
      %2448 = vmatpush1.bf16.msra.mxu0 %v1761
      %2449 = vmatprep.subr.bf16.mxu0 %v1773
      %2450 = vmatpush1.bf16.msra.mxu0 %v1772
      %2451 = vmatprep.subr.bf16.mxu0 %v1784
      %2452 = vmatpush1.bf16.msra.mxu0 %v1783
      %2453 = vmatprep.subr.bf16.mxu0 %v1795
      %2454 = vmatpush1.bf16.msra.mxu0 %v1794
      %2455 = vmatprep.subr.bf16.mxu0 %v1806
      %2456 = vmatpush1.bf16.msra.mxu0 %v1805
      %2457 = vmatprep.subr.bf16.mxu0 %v1817
      %2458 = vmatpush1.bf16.msra.mxu0 %v1816
      %2459 = vmatprep.subr.bf16.mxu0 %v1828
      %2460 = vmatpush1.bf16.msra.mxu0 %v1827
      %2461 = vmatprep.subr.bf16.mxu0 %v1839
      %2462 = vmatpush1.bf16.msra.mxu0 %v1838
      %2463 = vmatprep.subr.bf16.mxu0 %v1850
      %2464 = vmatpush1.bf16.msra.mxu0 %v1849
      %2465 = vmatprep.subr.bf16.mxu0 %v1861
      %2466 = vmatpush1.bf16.msra.mxu0 %v1860
      %2467 = vmatprep.subr.bf16.mxu0 %v1872
      %2468 = vmatpush1.bf16.msra.mxu0 %v1871
      %2469 = vmatprep.subr.bf16.mxu0 %v1883
      %2470 = vmatpush1.bf16.msra.mxu0 %v1882
      %2471 = vmatprep.subr.bf16.mxu0 %v1894
      %2472 = vmatpush1.bf16.msra.mxu0 %v1893
      %2473 = vmatprep.subr.bf16.mxu0 %v1905
      %2474 = vmatpush1.bf16.msra.mxu0 %v1904
      %2475 = vmatprep.mubr.bf16.mxu0 %v644
      %2476 = vmatmul.mubr.bf16.gmra.mrb[0].mxu0 %v643
      %v2477 = vpop.f32.mrb[0].mxu0
      %v2478 = vadd.f32 0.0, %v2477
      %v2479 = vpop.f32.mrb[0].mxu0
      %v2480 = vadd.f32 0.0, %v2479
      %v2481 = vpop.f32.mrb[0].mxu0
      %v2482 = vpop.f32.mrb[0].mxu0
      %2483 = vdwg.mxu0
      %2484 = vmatprep.subr.bf16.mxu0 %v1916
      %2485 = vmatpush1.bf16.msra.mxu0 %v1915
      %2486 = vmatprep.subr.bf16.mxu0 %v1927
      %2487 = vmatpush1.bf16.msra.mxu0 %v1926
      %2488 = vmatprep.subr.bf16.mxu0 %v1938
      %2489 = vmatpush1.bf16.msra.mxu0 %v1937
      %2490 = vmatprep.subr.bf16.mxu0 %v1949
      %2491 = vmatpush1.bf16.msra.mxu0 %v1948
      %2492 = vmatprep.subr.bf16.mxu0 %v1960
      %2493 = vmatpush1.bf16.msra.mxu0 %v1959
      %2494 = vmatprep.subr.bf16.mxu0 %v1971
      %2495 = vmatpush1.bf16.msra.mxu0 %v1970
      %2496 = vmatprep.subr.bf16.mxu0 %v1982
      %2497 = vmatpush1.bf16.msra.mxu0 %v1981
      %2498 = vmatprep.subr.bf16.mxu0 %v1993
      %2499 = vmatpush1.bf16.msra.mxu0 %v1992
      %2500 = vmatprep.subr.bf16.mxu0 %v2004
      %2501 = vmatpush1.bf16.msra.mxu0 %v2003
      %2502 = vmatprep.subr.bf16.mxu0 %v2015
      %2503 = vmatpush1.bf16.msra.mxu0 %v2014
      %2504 = vmatprep.subr.bf16.mxu0 %v2026
      %2505 = vmatpush1.bf16.msra.mxu0 %v2025
      %2506 = vmatprep.subr.bf16.mxu0 %v2037
      %2507 = vmatpush1.bf16.msra.mxu0 %v2036
      %2508 = vmatprep.subr.bf16.mxu0 %v2048
      %2509 = vmatpush1.bf16.msra.mxu0 %v2047
      %2510 = vmatprep.subr.bf16.mxu0 %v2059
      %2511 = vmatpush1.bf16.msra.mxu0 %v2058
      %2512 = vmatprep.subr.bf16.mxu0 %v2070
      %2513 = vmatpush1.bf16.msra.mxu0 %v2069
      %2514 = vmatprep.subr.bf16.mxu0 %v2081
      %2515 = vmatpush1.bf16.msra.mxu0 %v2080
      %2516 = vmatprep.mubr.bf16.mxu0 %v646
      %2517 = vmatmul.mubr.bf16.gmra.mrb[0].mxu0 %v645
      %v2518 = vpop.f32.mrb[0].mxu0
      %v2519 = vadd.f32 %v2478, %v2518
      %v2520 = vpop.f32.mrb[0].mxu0
      %v2521 = vadd.f32 %v2480, %v2520
      %v2522 = vpop.f32.mrb[0].mxu0
      %v2523 = vpop.f32.mrb[0].mxu0
      %2524 = vdwg.mxu0
      %2525 = vmatprep.subr.bf16.mxu0 %v1742
      %2526 = vmatpush1.bf16.msra.mxu0 %v1741
      %2527 = vmatprep.subr.bf16.mxu0 %v1753
      %2528 = vmatpush1.bf16.msra.mxu0 %v1752
      %2529 = vmatprep.subr.bf16.mxu0 %v1764
      %2530 = vmatpush1.bf16.msra.mxu0 %v1763
      %2531 = vmatprep.subr.bf16.mxu0 %v1775
      %2532 = vmatpush1.bf16.msra.mxu0 %v1774
      %2533 = vmatprep.subr.bf16.mxu0 %v1786
      %2534 = vmatpush1.bf16.msra.mxu0 %v1785
      %2535 = vmatprep.subr.bf16.mxu0 %v1797
      %2536 = vmatpush1.bf16.msra.mxu0 %v1796
      %2537 = vmatprep.subr.bf16.mxu0 %v1808
      %2538 = vmatpush1.bf16.msra.mxu0 %v1807
      %2539 = vmatprep.subr.bf16.mxu0 %v1819
      %2540 = vmatpush1.bf16.msra.mxu0 %v1818
      %2541 = vmatprep.subr.bf16.mxu0 %v1830
      %2542 = vmatpush1.bf16.msra.mxu0 %v1829
      %2543 = vmatprep.subr.bf16.mxu0 %v1841
      %2544 = vmatpush1.bf16.msra.mxu0 %v1840
      %2545 = vmatprep.subr.bf16.mxu0 %v1852
      %2546 = vmatpush1.bf16.msra.mxu0 %v1851
      %2547 = vmatprep.subr.bf16.mxu0 %v1863
      %2548 = vmatpush1.bf16.msra.mxu0 %v1862
      %2549 = vmatprep.subr.bf16.mxu0 %v1874
      %2550 = vmatpush1.bf16.msra.mxu0 %v1873
      %2551 = vmatprep.subr.bf16.mxu0 %v1885
      %2552 = vmatpush1.bf16.msra.mxu0 %v1884
      %2553 = vmatprep.subr.bf16.mxu0 %v1896
      %2554 = vmatpush1.bf16.msra.mxu0 %v1895
      %2555 = vmatprep.subr.bf16.mxu0 %v1907
      %2556 = vmatpush1.bf16.msra.mxu0 %v1906
      %2557 = vmatprep.mubr.bf16.mxu0 %v644
      %2558 = vmatmul.mubr.bf16.gmra.mrb[0].mxu0 %v643
      %v2559 = vpop.f32.mrb[0].mxu0
      %v2560 = vadd.f32 0.0, %v2559
      %v2561 = vpop.f32.mrb[0].mxu0
      %v2562 = vadd.f32 0.0, %v2561
      %v2563 = vpop.f32.mrb[0].mxu0
      %v2564 = vpop.f32.mrb[0].mxu0
      %2565 = vdwg.mxu0
      %2566 = vmatprep.subr.bf16.mxu0 %v1918
      %2567 = vmatpush1.bf16.msra.mxu0 %v1917
      %2568 = vmatprep.subr.bf16.mxu0 %v1929
      %2569 = vmatpush1.bf16.msra.mxu0 %v1928
      %2570 = vmatprep.subr.bf16.mxu0 %v1940
      %2571 = vmatpush1.bf16.msra.mxu0 %v1939
      %2572 = vmatprep.subr.bf16.mxu0 %v1951
      %2573 = vmatpush1.bf16.msra.mxu0 %v1950
      %2574 = vmatprep.subr.bf16.mxu0 %v1962
      %2575 = vmatpush1.bf16.msra.mxu0 %v1961
      %2576 = vmatprep.subr.bf16.mxu0 %v1973
      %2577 = vmatpush1.bf16.msra.mxu0 %v1972
      %2578 = vmatprep.subr.bf16.mxu0 %v1984
      %2579 = vmatpush1.bf16.msra.mxu0 %v1983
      %2580 = vmatprep.subr.bf16.mxu0 %v1995
      %2581 = vmatpush1.bf16.msra.mxu0 %v1994
      %2582 = vmatprep.subr.bf16.mxu0 %v2006
      %2583 = vmatpush1.bf16.msra.mxu0 %v2005
      %2584 = vmatprep.subr.bf16.mxu0 %v2017
      %2585 = vmatpush1.bf16.msra.mxu0 %v2016
      %2586 = vmatprep.subr.bf16.mxu0 %v2028
      %2587 = vmatpush1.bf16.msra.mxu0 %v2027
      %2588 = vmatprep.subr.bf16.mxu0 %v2039
      %2589 = vmatpush1.bf16.msra.mxu0 %v2038
      %2590 = vmatprep.subr.bf16.mxu0 %v2050
      %2591 = vmatpush1.bf16.msra.mxu0 %v2049
      %2592 = vmatprep.subr.bf16.mxu0 %v2061
      %2593 = vmatpush1.bf16.msra.mxu0 %v2060
      %2594 = vmatprep.subr.bf16.mxu0 %v2072
      %2595 = vmatpush1.bf16.msra.mxu0 %v2071
      %2596 = vmatprep.subr.bf16.mxu0 %v2083
      %2597 = vmatpush1.bf16.msra.mxu0 %v2082
      %2598 = vmatprep.mubr.bf16.mxu0 %v646
      %2599 = vmatmul.mubr.bf16.gmra.mrb[0].mxu0 %v645
      %v2600 = vpop.f32.mrb[0].mxu0
      %v2601 = vadd.f32 %v2560, %v2600
      %v2602 = vpop.f32.mrb[0].mxu0
      %v2603 = vadd.f32 %v2562, %v2602
      %v2604 = vpop.f32.mrb[0].mxu0
      %v2605 = vpop.f32.mrb[0].mxu0
      %2606 = vdwg.mxu0
      %2607 = vmatprep.subr.bf16.mxu0 %v1744
      %2608 = vmatpush1.bf16.msra.mxu0 %v1743
      %2609 = vmatprep.subr.bf16.mxu0 %v1755
      %2610 = vmatpush1.bf16.msra.mxu0 %v1754
      %2611 = vmatprep.subr.bf16.mxu0 %v1766
      %2612 = vmatpush1.bf16.msra.mxu0 %v1765
      %2613 = vmatprep.subr.bf16.mxu0 %v1777
      %2614 = vmatpush1.bf16.msra.mxu0 %v1776
      %2615 = vmatprep.subr.bf16.mxu0 %v1788
      %2616 = vmatpush1.bf16.msra.mxu0 %v1787
      %2617 = vmatprep.subr.bf16.mxu0 %v1799
      %2618 = vmatpush1.bf16.msra.mxu0 %v1798
      %2619 = vmatprep.subr.bf16.mxu0 %v1810
      %2620 = vmatpush1.bf16.msra.mxu0 %v1809
      %2621 = vmatprep.subr.bf16.mxu0 %v1821
      %2622 = vmatpush1.bf16.msra.mxu0 %v1820
      %2623 = vmatprep.subr.bf16.mxu0 %v1832
      %2624 = vmatpush1.bf16.msra.mxu0 %v1831
      %2625 = vmatprep.subr.bf16.mxu0 %v1843
      %2626 = vmatpush1.bf16.msra.mxu0 %v1842
      %2627 = vmatprep.subr.bf16.mxu0 %v1854
      %2628 = vmatpush1.bf16.msra.mxu0 %v1853
      %2629 = vmatprep.subr.bf16.mxu0 %v1865
      %2630 = vmatpush1.bf16.msra.mxu0 %v1864
      %2631 = vmatprep.subr.bf16.mxu0 %v1876
      %2632 = vmatpush1.bf16.msra.mxu0 %v1875
      %2633 = vmatprep.subr.bf16.mxu0 %v1887
      %2634 = vmatpush1.bf16.msra.mxu0 %v1886
      %2635 = vmatprep.subr.bf16.mxu0 %v1898
      %2636 = vmatpush1.bf16.msra.mxu0 %v1897
      %2637 = vmatprep.subr.bf16.mxu0 %v1909
      %2638 = vmatpush1.bf16.msra.mxu0 %v1908
      %2639 = vmatprep.mubr.bf16.mxu0 %v644
      %2640 = vmatmul.mubr.bf16.gmra.mrb[0].mxu0 %v643
      %v2641 = vpop.f32.mrb[0].mxu0
      %v2642 = vadd.f32 0.0, %v2641
      %v2643 = vpop.f32.mrb[0].mxu0
      %v2644 = vadd.f32 0.0, %v2643
      %v2645 = vpop.f32.mrb[0].mxu0
      %v2646 = vpop.f32.mrb[0].mxu0
      %2647 = vdwg.mxu0
      %2648 = vmatprep.subr.bf16.mxu0 %v1920
      %2649 = vmatpush1.bf16.msra.mxu0 %v1919
      %2650 = vmatprep.subr.bf16.mxu0 %v1931
      %2651 = vmatpush1.bf16.msra.mxu0 %v1930
      %2652 = vmatprep.subr.bf16.mxu0 %v1942
      %2653 = vmatpush1.bf16.msra.mxu0 %v1941
      %2654 = vmatprep.subr.bf16.mxu0 %v1953
      %2655 = vmatpush1.bf16.msra.mxu0 %v1952
      %2656 = vmatprep.subr.bf16.mxu0 %v1964
      %2657 = vmatpush1.bf16.msra.mxu0 %v1963
      %2658 = vmatprep.subr.bf16.mxu0 %v1975
      %2659 = vmatpush1.bf16.msra.mxu0 %v1974
      %2660 = vmatprep.subr.bf16.mxu0 %v1986
      %2661 = vmatpush1.bf16.msra.mxu0 %v1985
      %2662 = vmatprep.subr.bf16.mxu0 %v1997
      %2663 = vmatpush1.bf16.msra.mxu0 %v1996
      %2664 = vmatprep.subr.bf16.mxu0 %v2008
      %2665 = vmatpush1.bf16.msra.mxu0 %v2007
      %2666 = vmatprep.subr.bf16.mxu0 %v2019
      %2667 = vmatpush1.bf16.msra.mxu0 %v2018
      %2668 = vmatprep.subr.bf16.mxu0 %v2030
      %2669 = vmatpush1.bf16.msra.mxu0 %v2029
      %2670 = vmatprep.subr.bf16.mxu0 %v2041
      %2671 = vmatpush1.bf16.msra.mxu0 %v2040
      %2672 = vmatprep.subr.bf16.mxu0 %v2052
      %2673 = vmatpush1.bf16.msra.mxu0 %v2051
      %2674 = vmatprep.subr.bf16.mxu0 %v2063
      %2675 = vmatpush1.bf16.msra.mxu0 %v2062
      %2676 = vmatprep.subr.bf16.mxu0 %v2074
      %2677 = vmatpush1.bf16.msra.mxu0 %v2073
      %2678 = vmatprep.subr.bf16.mxu0 %v2085
      %2679 = vmatpush1.bf16.msra.mxu0 %v2084
      %2680 = vmatprep.mubr.bf16.mxu0 %v646
      %2681 = vmatmul.mubr.bf16.gmra.mrb[0].mxu0 %v645
      %v2682 = vpop.f32.mrb[0].mxu0
      %v2683 = vadd.f32 %v2642, %v2682
      %v2684 = vpop.f32.mrb[0].mxu0
      %v2685 = vadd.f32 %v2644, %v2684
      %v2686 = vpop.f32.mrb[0].mxu0
      %v2687 = vpop.f32.mrb[0].mxu0
      %2688 = vdwg.mxu0
      %2689 = vmatprep.subr.bf16.mxu0 %v1746
      %2690 = vmatpush1.bf16.msra.mxu0 %v1745
      %2691 = vmatprep.subr.bf16.mxu0 %v1757
      %2692 = vmatpush1.bf16.msra.mxu0 %v1756
      %2693 = vmatprep.subr.bf16.mxu0 %v1768
      %2694 = vmatpush1.bf16.msra.mxu0 %v1767
      %2695 = vmatprep.subr.bf16.mxu0 %v1779
      %2696 = vmatpush1.bf16.msra.mxu0 %v1778
      %2697 = vmatprep.subr.bf16.mxu0 %v1790
      %2698 = vmatpush1.bf16.msra.mxu0 %v1789
      %2699 = vmatprep.subr.bf16.mxu0 %v1801
      %2700 = vmatpush1.bf16.msra.mxu0 %v1800
      %2701 = vmatprep.subr.bf16.mxu0 %v1812
      %2702 = vmatpush1.bf16.msra.mxu0 %v1811
      %2703 = vmatprep.subr.bf16.mxu0 %v1823
      %2704 = vmatpush1.bf16.msra.mxu0 %v1822
      %2705 = vmatprep.subr.bf16.mxu0 %v1834
      %2706 = vmatpush1.bf16.msra.mxu0 %v1833
      %2707 = vmatprep.subr.bf16.mxu0 %v1845
      %2708 = vmatpush1.bf16.msra.mxu0 %v1844
      %2709 = vmatprep.subr.bf16.mxu0 %v1856
      %2710 = vmatpush1.bf16.msra.mxu0 %v1855
      %2711 = vmatprep.subr.bf16.mxu0 %v1867
      %2712 = vmatpush1.bf16.msra.mxu0 %v1866
      %2713 = vmatprep.subr.bf16.mxu0 %v1878
      %2714 = vmatpush1.bf16.msra.mxu0 %v1877
      %2715 = vmatprep.subr.bf16.mxu0 %v1889
      %2716 = vmatpush1.bf16.msra.mxu0 %v1888
      %2717 = vmatprep.subr.bf16.mxu0 %v1900
      %2718 = vmatpush1.bf16.msra.mxu0 %v1899
      %2719 = vmatprep.subr.bf16.mxu0 %v1911
      %2720 = vmatpush1.bf16.msra.mxu0 %v1910
      %2721 = vmatprep.mubr.bf16.mxu0 %v644
      %2722 = vmatmul.mubr.bf16.gmra.mrb[0].mxu0 %v643
      %v2723 = vpop.f32.mrb[0].mxu0
      %v2724 = vadd.f32 0.0, %v2723
      %v2725 = vpop.f32.mrb[0].mxu0
      %v2726 = vadd.f32 0.0, %v2725
      %v2727 = vpop.f32.mrb[0].mxu0
      %v2728 = vpop.f32.mrb[0].mxu0
      %2729 = vdwg.mxu0
      %2730 = vmatprep.subr.bf16.mxu0 %v1922
      %2731 = vmatpush1.bf16.msra.mxu0 %v1921
      %2732 = vmatprep.subr.bf16.mxu0 %v1933
      %2733 = vmatpush1.bf16.msra.mxu0 %v1932
      %2734 = vmatprep.subr.bf16.mxu0 %v1944
      %2735 = vmatpush1.bf16.msra.mxu0 %v1943
      %2736 = vmatprep.subr.bf16.mxu0 %v1955
      %2737 = vmatpush1.bf16.msra.mxu0 %v1954
      %2738 = vmatprep.subr.bf16.mxu0 %v1966
      %2739 = vmatpush1.bf16.msra.mxu0 %v1965
      %2740 = vmatprep.subr.bf16.mxu0 %v1977
      %2741 = vmatpush1.bf16.msra.mxu0 %v1976
      %2742 = vmatprep.subr.bf16.mxu0 %v1988
      %2743 = vmatpush1.bf16.msra.mxu0 %v1987
      %2744 = vmatprep.subr.bf16.mxu0 %v1999
      %2745 = vmatpush1.bf16.msra.mxu0 %v1998
      %2746 = vmatprep.subr.bf16.mxu0 %v2010
      %2747 = vmatpush1.bf16.msra.mxu0 %v2009
      %2748 = vmatprep.subr.bf16.mxu0 %v2021
      %2749 = vmatpush1.bf16.msra.mxu0 %v2020
      %2750 = vmatprep.subr.bf16.mxu0 %v2032
      %2751 = vmatpush1.bf16.msra.mxu0 %v2031
      %2752 = vmatprep.subr.bf16.mxu0 %v2043
      %2753 = vmatpush1.bf16.msra.mxu0 %v2042
      %2754 = vmatprep.subr.bf16.mxu0 %v2054
      %2755 = vmatpush1.bf16.msra.mxu0 %v2053
      %2756 = vmatprep.subr.bf16.mxu0 %v2065
      %2757 = vmatpush1.bf16.msra.mxu0 %v2064
      %2758 = vmatprep.subr.bf16.mxu0 %v2076
      %2759 = vmatpush1.bf16.msra.mxu0 %v2075
      %2760 = vmatprep.subr.bf16.mxu0 %v2087
      %2761 = vmatpush1.bf16.msra.mxu0 %v2086
      %2762 = vmatprep.mubr.bf16.mxu0 %v646
      %2763 = vmatmul.mubr.bf16.gmra.mrb[0].mxu0 %v645
      %v2764 = vpop.f32.mrb[0].mxu0
      %v2765 = vadd.f32 %v2724, %v2764
      %v2766 = vpop.f32.mrb[0].mxu0
      %v2767 = vadd.f32 %v2726, %v2766
      %v2768 = vpop.f32.mrb[0].mxu0
      %v2769 = vpop.f32.mrb[0].mxu0
      %2770 = vdwg.mxu0
      %2771 = vmatprep.subr.bf16.mxu0 %v1748
      %2772 = vmatpush1.bf16.msra.mxu0 %v1747
      %2773 = vmatprep.subr.bf16.mxu0 %v1759
      %2774 = vmatpush1.bf16.msra.mxu0 %v1758
      %2775 = vmatprep.subr.bf16.mxu0 %v1770
      %2776 = vmatpush1.bf16.msra.mxu0 %v1769
      %2777 = vmatprep.subr.bf16.mxu0 %v1781
      %2778 = vmatpush1.bf16.msra.mxu0 %v1780
      %2779 = vmatprep.subr.bf16.mxu0 %v1792
      %2780 = vmatpush1.bf16.msra.mxu0 %v1791
      %2781 = vmatprep.subr.bf16.mxu0 %v1803
      %2782 = vmatpush1.bf16.msra.mxu0 %v1802
      %2783 = vmatprep.subr.bf16.mxu0 %v1814
      %2784 = vmatpush1.bf16.msra.mxu0 %v1813
      %2785 = vmatprep.subr.bf16.mxu0 %v1825
      %2786 = vmatpush1.bf16.msra.mxu0 %v1824
      %2787 = vmatprep.subr.bf16.mxu0 %v1836
      %2788 = vmatpush1.bf16.msra.mxu0 %v1835
      %2789 = vmatprep.subr.bf16.mxu0 %v1847
      %2790 = vmatpush1.bf16.msra.mxu0 %v1846
      %2791 = vmatprep.subr.bf16.mxu0 %v1858
      %2792 = vmatpush1.bf16.msra.mxu0 %v1857
      %2793 = vmatprep.subr.bf16.mxu0 %v1869
      %2794 = vmatpush1.bf16.msra.mxu0 %v1868
      %2795 = vmatprep.subr.bf16.mxu0 %v1880
      %2796 = vmatpush1.bf16.msra.mxu0 %v1879
      %2797 = vmatprep.subr.bf16.mxu0 %v1891
      %2798 = vmatpush1.bf16.msra.mxu0 %v1890
      %2799 = vmatprep.subr.bf16.mxu0 %v1902
      %2800 = vmatpush1.bf16.msra.mxu0 %v1901
      %2801 = vmatprep.subr.bf16.mxu0 %v1913
      %2802 = vmatpush1.bf16.msra.mxu0 %v1912
      %2803 = vmatprep.mubr.bf16.mxu0 %v644
      %2804 = vmatmul.mubr.bf16.gmra.mrb[0].mxu0 %v643
      %v2805 = vpop.f32.mrb[0].mxu0
      %v2806 = vadd.f32 0.0, %v2805
      %v2807 = vpop.f32.mrb[0].mxu0
      %v2808 = vadd.f32 0.0, %v2807
      %v2809 = vpop.f32.mrb[0].mxu0
      %v2810 = vpop.f32.mrb[0].mxu0
      %2811 = vdwg.mxu0
      %2812 = vmatprep.subr.bf16.mxu0 %v1924
      %2813 = vmatpush1.bf16.msra.mxu0 %v1923
      %2814 = vmatprep.subr.bf16.mxu0 %v1935
      %2815 = vmatpush1.bf16.msra.mxu0 %v1934
      %2816 = vmatprep.subr.bf16.mxu0 %v1946
      %2817 = vmatpush1.bf16.msra.mxu0 %v1945
      %2818 = vmatprep.subr.bf16.mxu0 %v1957
      %2819 = vmatpush1.bf16.msra.mxu0 %v1956
      %2820 = vmatprep.subr.bf16.mxu0 %v1968
      %2821 = vmatpush1.bf16.msra.mxu0 %v1967
      %2822 = vmatprep.subr.bf16.mxu0 %v1979
      %2823 = vmatpush1.bf16.msra.mxu0 %v1978
      %2824 = vmatprep.subr.bf16.mxu0 %v1990
      %2825 = vmatpush1.bf16.msra.mxu0 %v1989
      %2826 = vmatprep.subr.bf16.mxu0 %v2001
      %2827 = vmatpush1.bf16.msra.mxu0 %v2000
      %2828 = vmatprep.subr.bf16.mxu0 %v2012
      %2829 = vmatpush1.bf16.msra.mxu0 %v2011
      %2830 = vmatprep.subr.bf16.mxu0 %v2023
      %2831 = vmatpush1.bf16.msra.mxu0 %v2022
      %2832 = vmatprep.subr.bf16.mxu0 %v2034
      %2833 = vmatpush1.bf16.msra.mxu0 %v2033
      %2834 = vmatprep.subr.bf16.mxu0 %v2045
      %2835 = vmatpush1.bf16.msra.mxu0 %v2044
      %2836 = vmatprep.subr.bf16.mxu0 %v2056
      %2837 = vmatpush1.bf16.msra.mxu0 %v2055
      %2838 = vmatprep.subr.bf16.mxu0 %v2067
      %2839 = vmatpush1.bf16.msra.mxu0 %v2066
      %2840 = vmatprep.subr.bf16.mxu0 %v2078
      %2841 = vmatpush1.bf16.msra.mxu0 %v2077
      %2842 = vmatprep.subr.bf16.mxu0 %v2089
      %2843 = vmatpush1.bf16.msra.mxu0 %v2088
      %2844 = vmatprep.mubr.bf16.mxu0 %v646
      %2845 = vmatmul.mubr.bf16.gmra.mrb[0].mxu0 %v645
      %v2846 = vpop.f32.mrb[0].mxu0
      %v2847 = vadd.f32 %v2806, %v2846
      %v2848 = vpop.f32.mrb[0].mxu0
      %v2849 = vadd.f32 %v2808, %v2848
      %v2850 = vpop.f32.mrb[0].mxu0
      %v2851 = vpop.f32.mrb[0].mxu0
      %2852 = vdwg.mxu0
      %2853 = vmatprep.subr.bf16.mxu0 0
      %2854 = vmatpush1.bf16.msra.mxu0 %v1749
      %2855 = vmatprep.subr.bf16.mxu0 0
      %2856 = vmatpush1.bf16.msra.mxu0 %v1760
      %2857 = vmatprep.subr.bf16.mxu0 0
      %2858 = vmatpush1.bf16.msra.mxu0 %v1771
      %2859 = vmatprep.subr.bf16.mxu0 0
      %2860 = vmatpush1.bf16.msra.mxu0 %v1782
      %2861 = vmatprep.subr.bf16.mxu0 0
      %2862 = vmatpush1.bf16.msra.mxu0 %v1793
      %2863 = vmatprep.subr.bf16.mxu0 0
      %2864 = vmatpush1.bf16.msra.mxu0 %v1804
      %2865 = vmatprep.subr.bf16.mxu0 0
      %2866 = vmatpush1.bf16.msra.mxu0 %v1815
      %2867 = vmatprep.subr.bf16.mxu0 0
      %2868 = vmatpush1.bf16.msra.mxu0 %v1826
      %2869 = vmatprep.subr.bf16.mxu0 0
      %2870 = vmatpush1.bf16.msra.mxu0 %v1837
      %2871 = vmatprep.subr.bf16.mxu0 0
      %2872 = vmatpush1.bf16.msra.mxu0 %v1848
      %2873 = vmatprep.subr.bf16.mxu0 0
      %2874 = vmatpush1.bf16.msra.mxu0 %v1859
      %2875 = vmatprep.subr.bf16.mxu0 0
      %2876 = vmatpush1.bf16.msra.mxu0 %v1870
      %2877 = vmatprep.subr.bf16.mxu0 0
      %2878 = vmatpush1.bf16.msra.mxu0 %v1881
      %2879 = vmatprep.subr.bf16.mxu0 0
      %2880 = vmatpush1.bf16.msra.mxu0 %v1892
      %2881 = vmatprep.subr.bf16.mxu0 0
      %2882 = vmatpush1.bf16.msra.mxu0 %v1903
      %2883 = vmatprep.subr.bf16.mxu0 0
      %2884 = vmatpush1.bf16.msra.mxu0 %v1914
      %2885 = vmatprep.mubr.bf16.mxu0 %v644
      %2886 = vmatmul.mubr.bf16.gmra.mrb[0].mxu0 %v643
      %v2887 = vpop.f32.mrb[0].mxu0
      %v2888 = vadd.f32 0.0, %v2887
      %v2889 = vpop.f32.mrb[0].mxu0
      %v2890 = vpop.f32.mrb[0].mxu0
      %v2891 = vpop.f32.mrb[0].mxu0
      %2892 = vdwg.mxu0
      %2893 = vmatprep.subr.bf16.mxu0 0
      %2894 = vmatpush1.bf16.msra.mxu0 %v1925
      %2895 = vmatprep.subr.bf16.mxu0 0
      %2896 = vmatpush1.bf16.msra.mxu0 %v1936
      %2897 = vmatprep.subr.bf16.mxu0 0
      %2898 = vmatpush1.bf16.msra.mxu0 %v1947
      %2899 = vmatprep.subr.bf16.mxu0 0
      %2900 = vmatpush1.bf16.msra.mxu0 %v1958
      %2901 = vmatprep.subr.bf16.mxu0 0
      %2902 = vmatpush1.bf16.msra.mxu0 %v1969
      %2903 = vmatprep.subr.bf16.mxu0 0
      %2904 = vmatpush1.bf16.msra.mxu0 %v1980
      %2905 = vmatprep.subr.bf16.mxu0 0
      %2906 = vmatpush1.bf16.msra.mxu0 %v1991
      %2907 = vmatprep.subr.bf16.mxu0 0
      %2908 = vmatpush1.bf16.msra.mxu0 %v2002
      %2909 = vmatprep.subr.bf16.mxu0 0
      %2910 = vmatpush1.bf16.msra.mxu0 %v2013
      %2911 = vmatprep.subr.bf16.mxu0 0
      %2912 = vmatpush1.bf16.msra.mxu0 %v2024
      %2913 = vmatprep.subr.bf16.mxu0 0
      %2914 = vmatpush1.bf16.msra.mxu0 %v2035
      %2915 = vmatprep.subr.bf16.mxu0 0
      %2916 = vmatpush1.bf16.msra.mxu0 %v2046
      %2917 = vmatprep.subr.bf16.mxu0 0
      %2918 = vmatpush1.bf16.msra.mxu0 %v2057
      %2919 = vmatprep.subr.bf16.mxu0 0
      %2920 = vmatpush1.bf16.msra.mxu0 %v2068
      %2921 = vmatprep.subr.bf16.mxu0 0
      %2922 = vmatpush1.bf16.msra.mxu0 %v2079
      %2923 = vmatprep.subr.bf16.mxu0 0
      %2924 = vmatpush1.bf16.msra.mxu0 %v2090
      %2925 = vmatprep.mubr.bf16.mxu0 %v646
      %2926 = vmatmul.mubr.bf16.gmra.mrb[0].mxu0 %v645
      %v2927 = vpop.f32.mrb[0].mxu0
      %v2928 = vadd.f32 %v2888, %v2927
      %v2929 = vpop.f32.mrb[0].mxu0
      %v2930 = vpop.f32.mrb[0].mxu0
      %v2931 = vpop.f32.mrb[0].mxu0
      %2932 = vdwg.mxu0
      %v2933 = vadd.f32 %v240, %v2519
      %v2934 = vadd.f32 %v241, %v2521
      %v2935 = vadd.f32 %v242, %v2601
      %v2936 = vadd.f32 %v243, %v2603
      %v2937 = vadd.f32 %v244, %v2683
      %v2938 = vadd.f32 %v245, %v2685
      %v2939 = vadd.f32 %v246, %v2765
      %v2940 = vadd.f32 %v247, %v2767
      %v2941 = vadd.f32 %v248, %v2847
      %v2942 = vadd.f32 %v249, %v2849
      %v2943 = vadd.f32 %v250, %v2928
      %2944 = vst [vmem:[#allocation2] sm:$0xff] %v2933
      %2945 = vst [vmem:[#allocation2 + $0x8] sm:$0xff] %v2934
      %2946 = vst [vmem:[#allocation2 + $0x10] sm:$0xff] %v2935
      %2947 = vst [vmem:[#allocation2 + $0x18] sm:$0xff] %v2936
      %2948 = vst [vmem:[#allocation2 + $0x20] sm:$0xff] %v2937
      %2949 = vst [vmem:[#allocation2 + $0x28] sm:$0xff] %v2938
      %2950 = vst [vmem:[#allocation2 + $0x30] sm:$0xff] %v2939
      %2951 = vst [vmem:[#allocation2 + $0x38] sm:$0xff] %v2940
      %2952 = vst [vmem:[#allocation2 + $0x40] sm:$0xff] %v2941
      %2953 = vst [vmem:[#allocation2 + $0x48] sm:$0xff] %v2942
      %2954 = vst [vmem:[#allocation2 + $0x50] sm:$0xff] %v2943
      %p2955 = scmp.eq.s32.totalorder %s19, 7
      // Predicated region
      $region37: #{l1_forward.1} parent=31 // pred_check
        %p2956 = pneg %p2955
      $region38: #{l1_forward.1} parent=31 // pred_check_branch
        %2958 = sbr.rel (%p2956) target = $region40
      $region39: #{l1_forward.1} parent=31 // pred_region
        %v2959 = vld [vmem:[#allocation2] sm:$0xff]
        %v2960 = vld [vmem:[#allocation2 + $0x8] sm:$0xff]
        %v2961 = vld [vmem:[#allocation2 + $0x10] sm:$0xff]
        %v2962 = vld [vmem:[#allocation2 + $0x18] sm:$0xff]
        %v2963 = vld [vmem:[#allocation2 + $0x20] sm:$0xff]
        %v2964 = vld [vmem:[#allocation2 + $0x28] sm:$0xff]
        %v2965 = vld [vmem:[#allocation2 + $0x30] sm:$0xff]
        %v2966 = vld [vmem:[#allocation2 + $0x38] sm:$0xff]
        %v2967 = vld [vmem:[#allocation2 + $0x40] sm:$0xff]
        %v2968 = vld [vmem:[#allocation2 + $0x48] sm:$0xff]
        %v2969 = vld [vmem:[#allocation2 + $0x50] sm:$0xff]
        %v2970 = vld [vmem:[%s2] sm:$0xff]
        %v2971 = vld [vmem:[%s2 + $0x8] sm:$0x7]
        %v2974 = vlaneseq
        %v2975 = vshrl.u32 %v2974, 7
        %v2976 = vsub.s32 0, %v2975
        %v2977 = vrot.slane %v2970, %v2976
        %v2978 = vlaneseq
        %v2979 = vshrl.u32 %v2978, 7
        %v2980 = vsub.s32 1, %v2979
        %v2981 = vrot.slane %v2970, %v2980
        %v2982 = vlaneseq
        %v2983 = vshrl.u32 %v2982, 7
        %v2984 = vsub.s32 2, %v2983
        %v2985 = vrot.slane %v2970, %v2984
        %v2986 = vlaneseq
        %v2987 = vshrl.u32 %v2986, 7
        %v2988 = vsub.s32 3, %v2987
        %v2989 = vrot.slane %v2970, %v2988
        %v2990 = vlaneseq
        %v2991 = vshrl.u32 %v2990, 7
        %v2992 = vsub.s32 4, %v2991
        %v2993 = vrot.slane %v2970, %v2992
        %v2994 = vlaneseq
        %v2995 = vshrl.u32 %v2994, 7
        %v2996 = vsub.s32 5, %v2995
        %v2997 = vrot.slane %v2970, %v2996
        %v2998 = vlaneseq
        %v2999 = vshrl.u32 %v2998, 7
        %v3000 = vsub.s32 6, %v2999
        %v3001 = vrot.slane %v2970, %v3000
        %v3002 = vlaneseq
        %v3003 = vshrl.u32 %v3002, 7
        %v3004 = vsub.s32 7, %v3003
        %v3005 = vrot.slane %v2970, %v3004
        %v3006 = vlaneseq
        %v3007 = vshrl.u32 %v3006, 7
        %v3008 = vsub.s32 0, %v3007
        %v3009 = vrot.slane %v2971, %v3008
        %v3010 = vlaneseq
        %v3011 = vshrl.u32 %v3010, 7
        %v3012 = vsub.s32 1, %v3011
        %v3013 = vrot.slane %v2971, %v3012
        %v3014 = vlaneseq
        %v3015 = vshrl.u32 %v3014, 7
        %v3016 = vsub.s32 2, %v3015
        %v3017 = vrot.slane %v2971, %v3016
        %v3029 = vadd.f32 %v2959, %v2977
        %v3030 = vadd.f32 %v2960, %v2981
        %v3031 = vadd.f32 %v2961, %v2985
        %v3032 = vadd.f32 %v2962, %v2989
        %v3033 = vadd.f32 %v2963, %v2993
        %v3034 = vadd.f32 %v2964, %v2997
        %v3035 = vadd.f32 %v2965, %v3001
        %v3036 = vadd.f32 %v2966, %v3005
        %v3037 = vadd.f32 %v2967, %v3009
        %v3038 = vadd.f32 %v2968, %v3013
        %v3039 = vadd.f32 %v2969, %v3017
        %3040 = vst [vmem:[%s223] sm:$0xff] %v3029
        %3041 = vst [vmem:[%s223 + $0x8] sm:$0xff] %v3030
        %3042 = vst [vmem:[%s223 + $0x10] sm:$0xff] %v3031
        %3043 = vst [vmem:[%s223 + $0x18] sm:$0xff] %v3032
        %3044 = vst [vmem:[%s223 + $0x20] sm:$0xff] %v3033
        %3045 = vst [vmem:[%s223 + $0x28] sm:$0xff] %v3034
        %3046 = vst [vmem:[%s223 + $0x30] sm:$0xff] %v3035
        %3047 = vst [vmem:[%s223 + $0x38] sm:$0xff] %v3036
        %3048 = vst [vmem:[%s223 + $0x40] sm:$0xff] %v3037
        %3049 = vst [vmem:[%s223 + $0x48] sm:$0xff] %v3038
        %3050 = vst [vmem:[%s223 + $0x50] sm:$0xff] %v3039
      $region40: #{l1_forward.1} parent=31 // pred_fallthru
        _
      %p3051 = scmp.lt.s32.totalorder %s18, 0
      %s3052 = scalar_select %p3051, %s18, 0
      %s3053 = smul.addr %s3052, 11
      %s3054 = smul.addr %s3053, 8
      %s3055 = scalar_lea.vmem %s3, %s3054
      // Predicated region
      $region41: #{l1_forward.1} parent=31 // pred_check
        %p3056 = pneg %p119
      $region42: #{l1_forward.1} parent=31 // pred_check_branch
        %3058 = sbr.rel (%p3056) target = $region44
      $region43: #{l1_forward.1} parent=31 // pred_region
        _
      $region44: #{l1_forward.1} parent=31 // pred_fallthru
        _
      // Predicated region
      $region45: #{l1_forward.1} parent=31 // pred_check
        %p3059 = pneg %p119
      $region46: #{l1_forward.1} parent=31 // pred_check_branch
        %3061 = sbr.rel (%p3059) target = $region48
      $region47: #{l1_forward.1} parent=31 // pred_region
        %p3062 = scmp.lt.s32.totalorder %s18, 0
        %s3063 = scalar_select %p3062, %s18, 0
        %s3064 = smul.addr %s3063, 11
        %s3065 = smul.addr %s3064, 8
        %s3066 = scalar_lea.vmem %s3, %s3065
      $region48: #{l1_forward.1} parent=31 // pred_fallthru
        _
    $region32: #{l1_forward.1} parent=5 // pred_fallthru
      _
    %p3067 = scmp.le.s32.totalorder 2, %s9
    // Predicated region
    $region49: #{l1_forward.1} parent=5 // pred_check
      %p3068 = pneg %p3067
    $region50: #{l1_forward.1} parent=5 // pred_check_branch
      %3070 = sbr.rel (%p3068) target = $region52
    $region51: #{l1_forward.1} parent=5 // pred_region
      %s3071 = ssub.s32 %s9, 2
    $region52: #{l1_forward.1} parent=5 // pred_fallthru
      _
  $region6: #{l1_forward.1} parent=0 // loop_footer
    %s13 = sadd.s32 1, %s9
  $region7: #{l1_forward.1} parent=0 // loop_footer_branch
    %8 = sbr.rel target = $region3
  $region8: #{l1_forward.1} parent=0 // loop_exit
    _

</llo_original>
